<compile_context>
chip_gen: v7x
topology: tpu7x:2x2x1
jax: 0.10.0
libtpu: 0.0.40
codegen_flags: <defaults>
</compile_context>

<pallas_src>
import functools

import jax
import jax.numpy as jnp
from jax.experimental import pallas as pl
from jax.experimental.pallas import tpu as pltpu


def _round_up(x, m):
    return ((x + m - 1) // m) * m


def _vmem_budget_bytes():
    """Generation-aware scoped-VMEM budget (v5e/v6e: 128 MiB, v7x: 64 MiB per TC)."""
    cap = 64 * 1024 * 1024  # conservative fallback (v7x-sized)
    try:
        info = pltpu.get_tpu_info()
        cap = int(getattr(info, "vmem_capacity_bytes", 0)) or cap
    except Exception:
        pass
    return min(int(cap * 0.8), 100 * 1024 * 1024)


# ---------------------------------------------------------------------------
# Fused small-graph kernel: conv1 + ReLU + conv2 + residual combine in a single
# pallas_call (everything VMEM-resident; no grid).
# ---------------------------------------------------------------------------
def _kcge_fused_kernel(a_ref, x_ref, w1_ref, b1_ref, w2_ref, b2_ref,
                       star_ref, sharp_ref, *, lamda, num_relations):
    x = x_ref[...]                         # bf16 (n_pad, d_pad)
    n_pad, d_pad = x.shape

    def conv(h_bf16, w_ref, b_ref):
        acc = jnp.zeros((n_pad, d_pad), jnp.float32)
        for r in range(num_relations):     # static unroll (small R)
            hw = jnp.dot(h_bf16, w_ref[r],
                         preferred_element_type=jnp.float32).astype(jnp.bfloat16)
            acc = acc + jnp.dot(a_ref[r], hw, preferred_element_type=jnp.float32)
        return acc + b_ref[...]            # bias (1, d_pad) broadcasts over rows

    z1 = jnp.maximum(conv(x, w1_ref, b1_ref), 0.0)
    # F.dropout(z1, training=self.training): identity in eval mode (inference here).
    z2 = conv(z1.astype(jnp.bfloat16), w2_ref, b2_ref)

    xf = x.astype(jnp.float32)
    star_ref[...] = ((xf + z1 + z2) * 0.25).astype(star_ref.dtype)
    temp = (xf, z1, z2)
    sharp = temp[lamda]
    for t in temp[lamda + 1:]:
        sharp = sharp + t
    sharp_ref[...] = (sharp * (1.0 / (4.0 - lamda))).astype(sharp_ref.dtype)


def kcge_fused_small(a, x_pad, w1, b1, w2, b2, *, lamda, vmem_limit):
    r = a.shape[0]
    n_pad, d_pad = x_pad.shape
    kernel = functools.partial(_kcge_fused_kernel, lamda=lamda, num_relations=r)
    return pl.pallas_call(
        kernel,
        out_shape=(jax.ShapeDtypeStruct((n_pad, d_pad), jnp.float32),
                   jax.ShapeDtypeStruct((n_pad, d_pad), jnp.float32)),
        compiler_params=pltpu.CompilerParams(vmem_limit_bytes=vmem_limit),
    )(a, x_pad, w1, b1, w2, b2)


# ---------------------------------------------------------------------------
# Pallas kernel 1 (large graphs): per-relation projection XW[r] = X @ W[r]
# (hoisted out of the row-tiled aggregation; bf16 in, bf16 out).
# grid = (R, row_tiles) -- fully parallel.
# ---------------------------------------------------------------------------
def _xw_kernel(x_ref, w_ref, o_ref):
    o_ref[...] = jnp.dot(
        x_ref[...], w_ref[...], preferred_element_type=jnp.float32
    ).astype(o_ref.dtype)


def relation_xw(x_pad, w_pad, *, tm, vmem_limit):
    n_pad, d_pad = x_pad.shape
    r = w_pad.shape[0]
    return pl.pallas_call(
        _xw_kernel,
        out_shape=jax.ShapeDtypeStruct((r, n_pad, d_pad), jnp.bfloat16),
        grid_spec=pltpu.PrefetchScalarGridSpec(
            num_scalar_prefetch=0,
            grid=(r, n_pad // tm),
            in_specs=[
                pl.BlockSpec((tm, d_pad), lambda ri, i: (i, 0)),
                pl.BlockSpec((None, d_pad, d_pad), lambda ri, i: (ri, 0, 0)),
            ],
            out_specs=pl.BlockSpec((None, tm, d_pad), lambda ri, i: (ri, i, 0)),
        ),
        compiler_params=pltpu.CompilerParams(
            dimension_semantics=("parallel", "parallel"),
            vmem_limit_bytes=vmem_limit,
        ),
    )(x_pad, w_pad)


# ---------------------------------------------------------------------------
# Pallas kernel 2a (large graphs): aggregation for conv1
#   z1[i-tile] = relu( sum_{r,k} A[r, i-tile, k-tile] @ XW[r, k-tile] + b )
# grid = (row_tiles, R, col_tiles); reduction over (r, k) in a f32 VMEM scratch.
# If xw_resident, XW is DMA'd once (constant index_map) and sliced in-kernel.
# ---------------------------------------------------------------------------
def _agg_relu_kernel(a_ref, xw_ref, b_ref, o_ref, acc_ref, *, xw_resident, tk):
    ri = pl.program_id(1)
    k = pl.program_id(2)

    @pl.when((ri == 0) & (k == 0))
    def _():
        acc_ref[...] = jnp.zeros_like(acc_ref)

    if xw_resident:
        off = pl.multiple_of(k * tk, tk)
        xw = xw_ref.at[ri][pl.ds(off, tk), :]
    else:
        xw = xw_ref[...]
    acc_ref[...] += jnp.dot(a_ref[...], xw, preferred_element_type=jnp.float32)

    @pl.when((ri == pl.num_programs(1) - 1) & (k == pl.num_programs(2) - 1))
    def _():
        o_ref[...] = jnp.maximum(acc_ref[...] + b_ref[...], 0.0).astype(o_ref.dtype)


def ecge_aggregate_relu(a, xw, b_pad, *, tm, tk, xw_resident, vmem_limit):
    r, n_pad, _ = a.shape
    d_pad = xw.shape[-1]
    if xw_resident:
        xw_spec = pl.BlockSpec((r, n_pad, d_pad), lambda i, ri, k: (0, 0, 0))
    else:
        xw_spec = pl.BlockSpec((None, tk, d_pad), lambda i, ri, k: (ri, k, 0))
    kernel = functools.partial(_agg_relu_kernel, xw_resident=xw_resident, tk=tk)
    return pl.pallas_call(
        kernel,
        out_shape=jax.ShapeDtypeStruct((n_pad, d_pad), jnp.bfloat16),  # bf16 z1
        grid_spec=pltpu.PrefetchScalarGridSpec(
            num_scalar_prefetch=0,
            grid=(n_pad // tm, r, n_pad // tk),
            in_specs=[
                pl.BlockSpec((None, tm, tk), lambda i, ri, k: (ri, i, k)),
                xw_spec,
                pl.BlockSpec((1, d_pad), lambda i, ri, k: (0, 0)),
            ],
            out_specs=pl.BlockSpec((tm, d_pad), lambda i, ri, k: (i, 0)),
            scratch_shapes=[pltpu.VMEM((tm, d_pad), jnp.float32)],
        ),
        compiler_params=pltpu.CompilerParams(
            dimension_semantics=("parallel", "arbitrary", "arbitrary"),
            vmem_limit_bytes=vmem_limit,
        ),
    )(a, xw, b_pad)


# ---------------------------------------------------------------------------
# Pallas kernel 2b (large graphs): aggregation for conv2 with the residual
# combine fused into the epilogue:
#   z2      = sum_{r,k} A @ XW2 + b
#   z_star  = (x + z1 + z2) / 4
#   z_sharp = sum([x, z1, z2][lamda:]) / (4 - lamda)      (lamda static)
# ---------------------------------------------------------------------------
def _agg_combine_kernel(a_ref, xw_ref, b_ref, x_ref, z1_ref,
                        star_ref, sharp_ref, acc_ref, *, lamda, xw_resident, tk):
    ri = pl.program_id(1)
    k = pl.program_id(2)

    @pl.when((ri == 0) & (k == 0))
    def _():
        acc_ref[...] = jnp.zeros_like(acc_ref)

    if xw_resident:
        off = pl.multiple_of(k * tk, tk)
        xw = xw_ref.at[ri][pl.ds(off, tk), :]
    else:
        xw = xw_ref[...]
    acc_ref[...] += jnp.dot(a_ref[...], xw, preferred_element_type=jnp.float32)

    @pl.when((ri == pl.num_programs(1) - 1) & (k == pl.num_programs(2) - 1))
    def _():
        z2 = acc_ref[...] + b_ref[...]
        x = x_ref[...].astype(jnp.float32)
        z1 = z1_ref[...].astype(jnp.float32)
        star_ref[...] = ((x + z1 + z2) * 0.25).astype(star_ref.dtype)
        temp = (x, z1, z2)
        sharp = temp[lamda]
        for t in temp[lamda + 1:]:
            sharp = sharp + t
        sharp_ref[...] = (sharp * (1.0 / (4.0 - lamda))).astype(sharp_ref.dtype)


def ecge_aggregate_combine(a, xw, b_pad, x_pad, z1_pad, *, lamda, tm, tk,
                           xw_resident, vmem_limit):
    r, n_pad, _ = a.shape
    d_pad = xw.shape[-1]
    if xw_resident:
        xw_spec = pl.BlockSpec((r, n_pad, d_pad), lambda i, ri, k: (0, 0, 0))
    else:
        xw_spec = pl.BlockSpec((None, tk, d_pad), lambda i, ri, k: (ri, k, 0))
    kernel = functools.partial(_agg_combine_kernel, lamda=lamda,
                               xw_resident=xw_resident, tk=tk)
    row_spec = pl.BlockSpec((tm, d_pad), lambda i, ri, k: (i, 0))
    return pl.pallas_call(
        kernel,
        out_shape=(jax.ShapeDtypeStruct((n_pad, d_pad), jnp.float32),
                   jax.ShapeDtypeStruct((n_pad, d_pad), jnp.float32)),
        grid_spec=pltpu.PrefetchScalarGridSpec(
            num_scalar_prefetch=0,
            grid=(n_pad // tm, r, n_pad // tk),
            in_specs=[
                pl.BlockSpec((None, tm, tk), lambda i, ri, k: (ri, i, k)),
                xw_spec,
                pl.BlockSpec((1, d_pad), lambda i, ri, k: (0, 0)),
                row_spec,   # x tile (block index constant over r,k -> fetched once/tile)
                row_spec,   # z1 tile
            ],
            out_specs=(row_spec, row_spec),
            scratch_shapes=[pltpu.VMEM((tm, d_pad), jnp.float32)],
        ),
        compiler_params=pltpu.CompilerParams(
            dimension_semantics=("parallel", "arbitrary", "arbitrary"),
            vmem_limit_bytes=vmem_limit,
        ),
    )(a, xw, b_pad, x_pad, z1_pad)


# ---------------------------------------------------------------------------
# Glue: dense per-relation normalized adjacency from the edge list (bf16 stream).
# ---------------------------------------------------------------------------
def build_relation_adjacency(edge_index, edge_type, edge_weight, num_nodes,
                             num_relations, n_pad, dtype=jnp.bfloat16):
    row, col = edge_index[0], edge_index[1]
    ones = jnp.ones_like(col, dtype=jnp.float32)
    # PyTorch `degree(col, N)` counts unit in-degree (unweighted) -- matched here.
    deg = jnp.zeros((num_nodes,), jnp.float32).at[col].add(ones)
    # deg.pow(-0.5) would give inf for isolated nodes; mask to 0 instead (identical
    # result whenever deg > 0, avoids inf/NaN propagation for general inputs).
    deg_inv_sqrt = jnp.where(deg > 0, deg ** -0.5, 0.0)
    norm = deg_inv_sqrt[row] * deg_inv_sqrt[col]
    val = norm * edge_weight.astype(jnp.float32)
    a = jnp.zeros((num_relations, n_pad, n_pad), jnp.float32)
    a = a.at[edge_type, col, row].add(val)
    return a.astype(dtype)   # bf16 cast fuses with the scatter consumer


# ---------------------------------------------------------------------------
# Forward pass
# ---------------------------------------------------------------------------
def kcge_forward(x, edge_index, edge_type, edge_weight, params, *, lamda):
    n, d = x.shape
    num_relations = params["w1"].shape[0]
    d_pad = _round_up(d, 128)        # lane-dense MXU operands and unmasked stores
    vmem_limit = _vmem_budget_bytes()

    n_small = _round_up(n, 128)
    fused_bytes = (num_relations * n_small * n_small * 2        # A (bf16)
                   + 2 * num_relations * d_pad * d_pad * 2      # W1, W2 (bf16)
                   + n_small * d_pad * 2                        # x (bf16)
                   + 6 * n_small * d_pad * 4)                   # z1/z2/outputs/temps (f32)
    use_fused = (n_small <= 512) and (2 * fused_bytes <= vmem_limit)

    if use_fused or n <= 512:
        n_pad = n_small
        tm = tk = n_pad
    else:
        n_pad = _round_up(n, 512)
        # >= 4 row tiles so the "parallel" row axis shards across v7x's 2 TensorCores.
        tm = 512 if (n_pad // 512) >= 4 else 256
        tk = 512

    x_pad = jnp.pad(x, ((0, n_pad - n), (0, d_pad - d))).astype(jnp.bfloat16)
    w1 = jnp.pad(params["w1"], ((0, 0), (0, d_pad - d), (0, d_pad - d))).astype(jnp.bfloat16)
    w2 = jnp.pad(params["w2"], ((0, 0), (0, d_pad - d), (0, d_pad - d))).astype(jnp.bfloat16)
    b1 = jnp.pad(params["b1"], (0, d_pad - d)).astype(jnp.float32).reshape(1, d_pad)
    b2 = jnp.pad(params["b2"], (0, d_pad - d)).astype(jnp.float32).reshape(1, d_pad)

    a = build_relation_adjacency(edge_index, edge_type, edge_weight,
                                 n, num_relations, n_pad)

    if use_fused:
        # Single kernel: both convs + ReLU + combine, all VMEM-resident.
        z_star_pad, z_sharp_pad = kcge_fused_small(
            a, x_pad, w1, b1, w2, b2, lamda=lamda, vmem_limit=vmem_limit)
    else:
        # Keep XW VMEM-resident in the aggregation when it fits (x2 double buffers).
        xw_bytes = num_relations * n_pad * d_pad * 2
        xw_resident = (2 * xw_bytes + 8 * 1024 * 1024) <= vmem_limit

        # conv1: hoisted per-relation bf16 projection, then tiled aggregation (+ fused ReLU)
        xw1 = relation_xw(x_pad, w1, tm=tm, vmem_limit=vmem_limit)
        z1_pad = ecge_aggregate_relu(a, xw1, b1, tm=tm, tk=tk,
                                     xw_resident=xw_resident, vmem_limit=vmem_limit)

        # F.dropout(z1, training=self.training): identity in eval mode (inference here).

        # conv2 with the residual combine fused into its epilogue (z1 streamed in bf16)
        xw2 = relation_xw(z1_pad, w2, tm=tm, vmem_limit=vmem_limit)
        z_star_pad, z_sharp_pad = ecge_aggregate_combine(
            a, xw2, b2, x_pad, z1_pad, lamda=lamda, tm=tm, tk=tk,
            xw_resident=xw_resident, vmem_limit=vmem_limit)

    z_star = z_star_pad[:n, :d].astype(x.dtype)
    z_sharp = z_sharp_pad[:n, :d].astype(x.dtype)
    return z_star, z_sharp


# ---------------------------------------------------------------------------
# Deterministic parameter init (xavier_uniform for weights, zeros for bias)
# ---------------------------------------------------------------------------
def xavier_uniform(key, shape, dtype=jnp.float32):
    # torch.nn.init.xavier_uniform_ on (R, Din, Dout):
    #   fan_in = Din * Dout, fan_out = R * Dout (receptive field = trailing dims)
    r, din, dout = shape
    fan_in = din * dout
    fan_out = r * dout
    bound = (6.0 / (fan_in + fan_out)) ** 0.5
    return jax.random.uniform(key, shape, dtype, minval=-bound, maxval=bound)


# ---------------------------------------------------------------------------
# Pure-JAX f32 reference (kernel streams in bf16 -> tolerances loosened to 2e-2)
# ---------------------------------------------------------------------------
def kcge_reference(x, edge_index, edge_type, edge_weight, params, lamda):
    n = x.shape[0]
    r = params["w1"].shape[0]
    row, col = edge_index[0], edge_index[1]
    deg = jnp.zeros((n,), jnp.float32).at[col].add(1.0)
    dinv = jnp.where(deg > 0, deg ** -0.5, 0.0)
    norm = dinv[row] * dinv[col]
    a = jnp.zeros((r, n, n), jnp.float32).at[edge_type, col, row].add(norm * edge_weight)

    def conv(a_, h, w_, b_):
        return jnp.einsum("rij,jd,rde->ie", a_, h, w_) + b_

    z1 = jax.nn.relu(conv(a, x, params["w1"], params["b1"]))
    z2 = conv(a, z1, params["w2"], params["b2"])
    z_star = (x + z1 + z2) / 4.0
    temp = [x, z1, z2]
    z_sharp = sum(temp[lamda:]) / (4.0 - lamda)
    return z_star, z_sharp


if __name__ == "__main__":
    LAMDA = 1

    def make_case(key, n, d, r, e):
        k_x, k_row, k_col, k_type, k_w, k_w1, k_w2 = jax.random.split(key, 7)
        x = jax.random.normal(k_x, (n, d), dtype=jnp.float32)
        # ensure every node appears as a destination at least once (deg > 0)
        col = jnp.concatenate([jnp.arange(n, dtype=jnp.int32),
                               jax.random.randint(k_col, (e - n,), 0, n, dtype=jnp.int32)])
        row = jax.random.randint(k_row, (e,), 0, n, dtype=jnp.int32)
        edge_index = jnp.stack([row, col], axis=0)
        edge_type = jax.random.randint(k_type, (e,), 0, r, dtype=jnp.int32)
        edge_weight = jax.random.uniform(k_w, (e,), dtype=jnp.float32,
                                         minval=0.1, maxval=1.0)
        params = {
            "w1": xavier_uniform(k_w1, (r, d, d)),
            "b1": jnp.zeros((d,), jnp.float32),
            "w2": xavier_uniform(k_w2, (r, d, d)),
            "b2": jnp.zeros((d,), jnp.float32),
        }
        return x, edge_index, edge_type, edge_weight, params

    key = jax.random.PRNGKey(0)
    k_small, k_med = jax.random.split(key)

    # Small graph -> fully fused single-kernel path (N=16, D=32, R=3, E=48).
    case_s = make_case(k_small, 16, 32, 3, 48)
    z_star, z_sharp = kcge_forward(*case_s, lamda=LAMDA)
    jax.block_until_ready((z_star, z_sharp))
    zs_ref, zh_ref = kcge_reference(*case_s, LAMDA)
    assert jnp.allclose(z_star, zs_ref, rtol=2e-2, atol=2e-2)
    assert jnp.allclose(z_sharp, zh_ref, rtol=2e-2, atol=2e-2)

    # Larger graph -> tiled projection + aggregation path with resident XW
    # (N=640 -> n_pad=1024, tm=256, tk=512).
    case_m = make_case(k_med, 640, 32, 3, 2048)
    z_star_m, z_sharp_m = kcge_forward(*case_m, lamda=LAMDA)
    jax.block_until_ready((z_star_m, z_sharp_m))
    zs_ref_m, zh_ref_m = kcge_reference(*case_m, LAMDA)
    assert jnp.allclose(z_star_m, zs_ref_m, rtol=2e-2, atol=2e-2)
    assert jnp.allclose(z_sharp_m, zh_ref_m, rtol=2e-2, atol=2e-2)

    print("KERNEL_OK")
</pallas_src>

<mosaic_0001>
module attributes {stable_mosaic.version = 11 : i64} {
  func.func @_kcge_fused_kernel(%arg0: memref<3x128x128xbf16, #tpu.memory_space<vmem>>, %arg1: memref<128x128xbf16, #tpu.memory_space<vmem>>, %arg2: memref<3x128x128xbf16, #tpu.memory_space<vmem>>, %arg3: memref<1x128xf32, #tpu.memory_space<vmem>>, %arg4: memref<3x128x128xbf16, #tpu.memory_space<vmem>>, %arg5: memref<1x128xf32, #tpu.memory_space<vmem>>, %arg6: memref<128x128xf32, #tpu.memory_space<vmem>>, %arg7: memref<128x128xf32, #tpu.memory_space<vmem>>) attributes {dimension_semantics = [], scalar_prefetch = 0 : i64, scratch_operands = 0 : i64, tpu.core_type = #tpu.core_type<tc>} {
    %c0 = arith.constant 0 : index
    %c0_0 = arith.constant 0 : index
    %0 = vector.load %arg1[%c0, %c0_0] : memref<128x128xbf16, #tpu.memory_space<vmem>>, vector<128x128xbf16>
    %cst = arith.constant 0.000000e+00 : f32
    %1 = vector.broadcast %cst : f32 to vector<128x128xf32>
    %c0_1 = arith.constant 0 : index
    %c0_2 = arith.constant 0 : index
    %c0_3 = arith.constant 0 : index
    %2 = vector.load %arg2[%c0_1, %c0_2, %c0_3] : memref<3x128x128xbf16, #tpu.memory_space<vmem>>, vector<1x128x128xbf16>
    %3 = vector.shape_cast %2 : vector<1x128x128xbf16> to vector<128x128xbf16>
    %cst_4 = arith.constant dense<0.000000e+00> : vector<128x128xf32>
    %4 = tpu.matmul %0, %3, %cst_4 {dimension_numbers = #tpu.dot_dimension_numbers<[1], [0], [0], [1], [0, 0, 1, 1], [], []>} : vector<128x128xbf16>, vector<128x128xbf16>, vector<128x128xf32> -> vector<128x128xf32>
    %5 = arith.truncf %4 : vector<128x128xf32> to vector<128x128xbf16>
    %c0_5 = arith.constant 0 : index
    %c0_6 = arith.constant 0 : index
    %c0_7 = arith.constant 0 : index
    %6 = vector.load %arg0[%c0_5, %c0_6, %c0_7] : memref<3x128x128xbf16, #tpu.memory_space<vmem>>, vector<1x128x128xbf16>
    %7 = vector.shape_cast %6 : vector<1x128x128xbf16> to vector<128x128xbf16>
    %cst_8 = arith.constant dense<0.000000e+00> : vector<128x128xf32>
    %8 = tpu.matmul %7, %5, %cst_8 {dimension_numbers = #tpu.dot_dimension_numbers<[1], [0], [0], [1], [0, 0, 1, 1], [], []>} : vector<128x128xbf16>, vector<128x128xbf16>, vector<128x128xf32> -> vector<128x128xf32>
    %9 = arith.addf %1, %8 : vector<128x128xf32>
    %c1 = arith.constant 1 : index
    %c0_9 = arith.constant 0 : index
    %c0_10 = arith.constant 0 : index
    %10 = vector.load %arg2[%c1, %c0_9, %c0_10] : memref<3x128x128xbf16, #tpu.memory_space<vmem>>, vector<1x128x128xbf16>
    %11 = vector.shape_cast %10 : vector<1x128x128xbf16> to vector<128x128xbf16>
    %cst_11 = arith.constant dense<0.000000e+00> : vector<128x128xf32>
    %12 = tpu.matmul %0, %11, %cst_11 {dimension_numbers = #tpu.dot_dimension_numbers<[1], [0], [0], [1], [0, 0, 1, 1], [], []>} : vector<128x128xbf16>, vector<128x128xbf16>, vector<128x128xf32> -> vector<128x128xf32>
    %13 = arith.truncf %12 : vector<128x128xf32> to vector<128x128xbf16>
    %c1_12 = arith.constant 1 : index
    %c0_13 = arith.constant 0 : index
    %c0_14 = arith.constant 0 : index
    %14 = vector.load %arg0[%c1_12, %c0_13, %c0_14] : memref<3x128x128xbf16, #tpu.memory_space<vmem>>, vector<1x128x128xbf16>
    %15 = vector.shape_cast %14 : vector<1x128x128xbf16> to vector<128x128xbf16>
    %cst_15 = arith.constant dense<0.000000e+00> : vector<128x128xf32>
    %16 = tpu.matmul %15, %13, %cst_15 {dimension_numbers = #tpu.dot_dimension_numbers<[1], [0], [0], [1], [0, 0, 1, 1], [], []>} : vector<128x128xbf16>, vector<128x128xbf16>, vector<128x128xf32> -> vector<128x128xf32>
    %17 = arith.addf %9, %16 : vector<128x128xf32>
    %c2 = arith.constant 2 : index
    %c0_16 = arith.constant 0 : index
    %c0_17 = arith.constant 0 : index
    %18 = vector.load %arg2[%c2, %c0_16, %c0_17] : memref<3x128x128xbf16, #tpu.memory_space<vmem>>, vector<1x128x128xbf16>
    %19 = vector.shape_cast %18 : vector<1x128x128xbf16> to vector<128x128xbf16>
    %cst_18 = arith.constant dense<0.000000e+00> : vector<128x128xf32>
    %20 = tpu.matmul %0, %19, %cst_18 {dimension_numbers = #tpu.dot_dimension_numbers<[1], [0], [0], [1], [0, 0, 1, 1], [], []>} : vector<128x128xbf16>, vector<128x128xbf16>, vector<128x128xf32> -> vector<128x128xf32>
    %21 = arith.truncf %20 : vector<128x128xf32> to vector<128x128xbf16>
    %c2_19 = arith.constant 2 : index
    %c0_20 = arith.constant 0 : index
    %c0_21 = arith.constant 0 : index
    %22 = vector.load %arg0[%c2_19, %c0_20, %c0_21] : memref<3x128x128xbf16, #tpu.memory_space<vmem>>, vector<1x128x128xbf16>
    %23 = vector.shape_cast %22 : vector<1x128x128xbf16> to vector<128x128xbf16>
    %cst_22 = arith.constant dense<0.000000e+00> : vector<128x128xf32>
    %24 = tpu.matmul %23, %21, %cst_22 {dimension_numbers = #tpu.dot_dimension_numbers<[1], [0], [0], [1], [0, 0, 1, 1], [], []>} : vector<128x128xbf16>, vector<128x128xbf16>, vector<128x128xf32> -> vector<128x128xf32>
    %25 = arith.addf %17, %24 : vector<128x128xf32>
    %c0_23 = arith.constant 0 : index
    %c0_24 = arith.constant 0 : index
    %26 = vector.load %arg3[%c0_23, %c0_24] : memref<1x128xf32, #tpu.memory_space<vmem>>, vector<1x128xf32>
    %27 = vector.broadcast %26 : vector<1x128xf32> to vector<128x128xf32>
    %28 = arith.addf %25, %27 : vector<128x128xf32>
    %cst_25 = arith.constant 0.000000e+00 : f32
    %29 = vector.broadcast %cst_25 : f32 to vector<128x128xf32>
    %30 = arith.maximumf %28, %29 : vector<128x128xf32>
    %31 = arith.truncf %30 : vector<128x128xf32> to vector<128x128xbf16>
    %cst_26 = arith.constant 0.000000e+00 : f32
    %32 = vector.broadcast %cst_26 : f32 to vector<128x128xf32>
    %c0_27 = arith.constant 0 : index
    %c0_28 = arith.constant 0 : index
    %c0_29 = arith.constant 0 : index
    %33 = vector.load %arg4[%c0_27, %c0_28, %c0_29] : memref<3x128x128xbf16, #tpu.memory_space<vmem>>, vector<1x128x128xbf16>
    %34 = vector.shape_cast %33 : vector<1x128x128xbf16> to vector<128x128xbf16>
    %cst_30 = arith.constant dense<0.000000e+00> : vector<128x128xf32>
    %35 = tpu.matmul %31, %34, %cst_30 {dimension_numbers = #tpu.dot_dimension_numbers<[1], [0], [0], [1], [0, 0, 1, 1], [], []>} : vector<128x128xbf16>, vector<128x128xbf16>, vector<128x128xf32> -> vector<128x128xf32>
    %36 = arith.truncf %35 : vector<128x128xf32> to vector<128x128xbf16>
    %c0_31 = arith.constant 0 : index
    %c0_32 = arith.constant 0 : index
    %c0_33 = arith.constant 0 : index
    %37 = vector.load %arg0[%c0_31, %c0_32, %c0_33] : memref<3x128x128xbf16, #tpu.memory_space<vmem>>, vector<1x128x128xbf16>
    %38 = vector.shape_cast %37 : vector<1x128x128xbf16> to vector<128x128xbf16>
    %cst_34 = arith.constant dense<0.000000e+00> : vector<128x128xf32>
    %39 = tpu.matmul %38, %36, %cst_34 {dimension_numbers = #tpu.dot_dimension_numbers<[1], [0], [0], [1], [0, 0, 1, 1], [], []>} : vector<128x128xbf16>, vector<128x128xbf16>, vector<128x128xf32> -> vector<128x128xf32>
    %40 = arith.addf %32, %39 : vector<128x128xf32>
    %c1_35 = arith.constant 1 : index
    %c0_36 = arith.constant 0 : index
    %c0_37 = arith.constant 0 : index
    %41 = vector.load %arg4[%c1_35, %c0_36, %c0_37] : memref<3x128x128xbf16, #tpu.memory_space<vmem>>, vector<1x128x128xbf16>
    %42 = vector.shape_cast %41 : vector<1x128x128xbf16> to vector<128x128xbf16>
    %cst_38 = arith.constant dense<0.000000e+00> : vector<128x128xf32>
    %43 = tpu.matmul %31, %42, %cst_38 {dimension_numbers = #tpu.dot_dimension_numbers<[1], [0], [0], [1], [0, 0, 1, 1], [], []>} : vector<128x128xbf16>, vector<128x128xbf16>, vector<128x128xf32> -> vector<128x128xf32>
    %44 = arith.truncf %43 : vector<128x128xf32> to vector<128x128xbf16>
    %c1_39 = arith.constant 1 : index
    %c0_40 = arith.constant 0 : index
    %c0_41 = arith.constant 0 : index
    %45 = vector.load %arg0[%c1_39, %c0_40, %c0_41] : memref<3x128x128xbf16, #tpu.memory_space<vmem>>, vector<1x128x128xbf16>
    %46 = vector.shape_cast %45 : vector<1x128x128xbf16> to vector<128x128xbf16>
    %cst_42 = arith.constant dense<0.000000e+00> : vector<128x128xf32>
    %47 = tpu.matmul %46, %44, %cst_42 {dimension_numbers = #tpu.dot_dimension_numbers<[1], [0], [0], [1], [0, 0, 1, 1], [], []>} : vector<128x128xbf16>, vector<128x128xbf16>, vector<128x128xf32> -> vector<128x128xf32>
    %48 = arith.addf %40, %47 : vector<128x128xf32>
    %c2_43 = arith.constant 2 : index
    %c0_44 = arith.constant 0 : index
    %c0_45 = arith.constant 0 : index
    %49 = vector.load %arg4[%c2_43, %c0_44, %c0_45] : memref<3x128x128xbf16, #tpu.memory_space<vmem>>, vector<1x128x128xbf16>
    %50 = vector.shape_cast %49 : vector<1x128x128xbf16> to vector<128x128xbf16>
    %cst_46 = arith.constant dense<0.000000e+00> : vector<128x128xf32>
    %51 = tpu.matmul %31, %50, %cst_46 {dimension_numbers = #tpu.dot_dimension_numbers<[1], [0], [0], [1], [0, 0, 1, 1], [], []>} : vector<128x128xbf16>, vector<128x128xbf16>, vector<128x128xf32> -> vector<128x128xf32>
    %52 = arith.truncf %51 : vector<128x128xf32> to vector<128x128xbf16>
    %c2_47 = arith.constant 2 : index
    %c0_48 = arith.constant 0 : index
    %c0_49 = arith.constant 0 : index
    %53 = vector.load %arg0[%c2_47, %c0_48, %c0_49] : memref<3x128x128xbf16, #tpu.memory_space<vmem>>, vector<1x128x128xbf16>
    %54 = vector.shape_cast %53 : vector<1x128x128xbf16> to vector<128x128xbf16>
    %cst_50 = arith.constant dense<0.000000e+00> : vector<128x128xf32>
    %55 = tpu.matmul %54, %52, %cst_50 {dimension_numbers = #tpu.dot_dimension_numbers<[1], [0], [0], [1], [0, 0, 1, 1], [], []>} : vector<128x128xbf16>, vector<128x128xbf16>, vector<128x128xf32> -> vector<128x128xf32>
    %56 = arith.addf %48, %55 : vector<128x128xf32>
    %c0_51 = arith.constant 0 : index
    %c0_52 = arith.constant 0 : index
    %57 = vector.load %arg5[%c0_51, %c0_52] : memref<1x128xf32, #tpu.memory_space<vmem>>, vector<1x128xf32>
    %58 = vector.broadcast %57 : vector<1x128xf32> to vector<128x128xf32>
    %59 = arith.addf %56, %58 : vector<128x128xf32>
    %60 = arith.extf %0 : vector<128x128xbf16> to vector<128x128xf32>
    %61 = arith.addf %60, %30 : vector<128x128xf32>
    %62 = arith.addf %61, %59 : vector<128x128xf32>
    %cst_53 = arith.constant 2.500000e-01 : f32
    %63 = vector.broadcast %cst_53 : f32 to vector<128x128xf32>
    %64 = arith.mulf %62, %63 : vector<128x128xf32>
    %c0_54 = arith.constant 0 : index
    %c0_55 = arith.constant 0 : index
    %65 = vector.load %arg6[%c0_54, %c0_55] : memref<128x128xf32, #tpu.memory_space<vmem>>, vector<128x128xf32>
    tpu.vector_store %arg6[%c0_54, %c0_55], %64 {strides = array<i32>} : memref<128x128xf32, #tpu.memory_space<vmem>>, vector<128x128xf32>,
    %66 = arith.addf %30, %59 : vector<128x128xf32>
    %cst_56 = arith.constant 0.333333343 : f32
    %67 = vector.broadcast %cst_56 : f32 to vector<128x128xf32>
    %68 = arith.mulf %66, %67 : vector<128x128xf32>
    %c0_57 = arith.constant 0 : index
    %c0_58 = arith.constant 0 : index
    %69 = vector.load %arg7[%c0_57, %c0_58] : memref<128x128xf32, #tpu.memory_space<vmem>>, vector<128x128xf32>
    tpu.vector_store %arg7[%c0_57, %c0_58], %68 {strides = array<i32>} : memref<128x128xf32, #tpu.memory_space<vmem>>, vector<128x128xf32>,
    return
  }
}

</mosaic_0001>

<llo_original>
// kernel: tpu_custom_call.1
$region0: #{tpu_custom_call.1}
  #allocation0 [shape = 'u32[]', space=smem, size = 0x4, offset = 0x4, fixed_abs, tag = 'smem constant byte address 0x4 - core index']
  #allocation1 [shape = 'u32[144,128]{1,0:T(1,128)}', space=vmem, size = 0x12000, scoped, tag = 'internal scratch']
  %s0 = inlined_call_operand.hbm [shape: bf16[3,128,128], index: 0, kind: input, shape index: {}]
  %s1 = inlined_call_operand.hbm [shape: bf16[128,128], index: 1, kind: input, shape index: {}]
  %s2 = inlined_call_operand.hbm [shape: bf16[3,128,128], index: 2, kind: input, shape index: {}]
  %s3 = inlined_call_operand.vmem [shape: f32[1,128], index: 3, kind: input, shape index: {}]
  %s4 = inlined_call_operand.hbm [shape: bf16[3,128,128], index: 4, kind: input, shape index: {}]
  %s5 = inlined_call_operand.vmem [shape: f32[1,128], index: 5, kind: input, shape index: {}]
  %s6 = inlined_call_operand.hbm [shape: f32[128,128], index: 6, kind: output, shape index: {0}]
  %s7 = inlined_call_operand.hbm [shape: f32[128,128], index: 7, kind: output, shape index: {1}]
  %8 = xla_tuple %s6, %s7
  %s9 = sld [smem:[#allocation0]]
  $region58: #{tpu_custom_call.1} parent=0
    _
  %s11 = ssub.s32 1, %s9
  %s12 = scalar_select 0, %s11, %s9
  $region1: #{tpu_custom_call.1} parent=0
    #allocation2 [shape = 'u8[98304]{0}', space=vmem, size = 0x18000, scoped, tag = 'input window, operand 0, single buffered']
    #allocation3 [shape = 's32[1]{0}', space=sflag, size = 0x4, scoped, tag = 'scoped memory for tpu_custom_call.1']
    #allocation4 [shape = 's32[1]{0}', space=sflag, size = 0x4, scoped, tag = 'scoped memory for tpu_custom_call.1']
    #allocation5 [shape = 'u8[32768]{0}', space=vmem, size = 0x8000, scoped, tag = 'input window, operand 1, single buffered']
    #allocation6 [shape = 's32[1]{0}', space=sflag, size = 0x4, scoped, tag = 'scoped memory for tpu_custom_call.1']
    #allocation7 [shape = 'u8[98304]{0}', space=vmem, size = 0x18000, scoped, tag = 'input window, operand 2, single buffered']
    #allocation8 [shape = 'u8[98304]{0}', space=vmem, size = 0x18000, scoped, tag = 'input window, operand 4, single buffered']
    #allocation9 [shape = 's32[1]{0}', space=sflag, size = 0x4, scoped, tag = 'scoped memory for tpu_custom_call.1']
    #allocation10 [shape = 'u8[65536]{0}', space=vmem, size = 0x10000, scoped, tag = 'output window, operand 0, single buffered']
    #allocation11 [shape = 'u8[65536]{0}', space=vmem, size = 0x10000, scoped, tag = 'output window, operand 1, single buffered']
    #allocation12 [shape = 's32[1]{0}', space=sflag, size = 0x4, scoped, tag = 'scoped memory for tpu_custom_call.1']
    %13 = vsyncpa [#allocation3], 0
    %14 = vsyncpa [#allocation6], 0
    %15 = vsyncpa [#allocation9], 0
    %16 = vsyncpa [#allocation4], 0
    %17 = vsyncpa [#allocation12], 0
    // Predicated region
    $region2: #{tpu_custom_call.1} parent=1 // pred_check
      _
    $region3: #{tpu_custom_call.1} parent=1 // pred_check_branch
      %19 = sbr.rel (0) target = $region5
    $region4: #{tpu_custom_call.1} parent=1 // pred_region
      %s21 = ssub.s32 3072, 3072
      %22 = vsyncadd [#allocation3], %s21
      %s23 = sshll.u32 [#allocation2], 4
      %s24 = int_to_ptr.vmem [resolvable:$true] %s23
      %29 = dma.hbm_to_vmem [thread:$0]  %s0, 3072, %s24, [#allocation3], 64, 64, 4
    $region5: #{tpu_custom_call.1} parent=1 // pred_fallthru
      _
    // Predicated region
    $region6: #{tpu_custom_call.1} parent=1 // pred_check
      _
    $region7: #{tpu_custom_call.1} parent=1 // pred_check_branch
      %31 = sbr.rel (0) target = $region9
    $region8: #{tpu_custom_call.1} parent=1 // pred_region
      %s33 = ssub.s32 1024, 1024
      %34 = vsyncadd [#allocation6], %s33
      %s35 = sshll.u32 [#allocation5], 4
      %s36 = int_to_ptr.vmem [resolvable:$true] %s35
      %41 = dma.hbm_to_vmem [thread:$0]  %s1, 1024, %s36, [#allocation6], 64, 64, 4
    $region9: #{tpu_custom_call.1} parent=1 // pred_fallthru
      _
    // Predicated region
    $region10: #{tpu_custom_call.1} parent=1 // pred_check
      _
    $region11: #{tpu_custom_call.1} parent=1 // pred_check_branch
      %43 = sbr.rel (0) target = $region13
    $region12: #{tpu_custom_call.1} parent=1 // pred_region
      %s45 = ssub.s32 3072, 3072
      %46 = vsyncadd [#allocation6], %s45
      %s47 = sshll.u32 [#allocation7], 4
      %s48 = int_to_ptr.vmem [resolvable:$true] %s47
      %53 = dma.hbm_to_vmem [thread:$0]  %s2, 3072, %s48, [#allocation6], 64, 64, 4
    $region13: #{tpu_custom_call.1} parent=1 // pred_fallthru
      _
    // Predicated region
    $region14: #{tpu_custom_call.1} parent=1 // pred_check
      _
    $region15: #{tpu_custom_call.1} parent=1 // pred_check_branch
      %55 = sbr.rel (0) target = $region17
    $region16: #{tpu_custom_call.1} parent=1 // pred_region
      _
    $region17: #{tpu_custom_call.1} parent=1 // pred_fallthru
      _
    // Predicated region
    $region18: #{tpu_custom_call.1} parent=1 // pred_check
      _
    $region19: #{tpu_custom_call.1} parent=1 // pred_check_branch
      %57 = sbr.rel (0) target = $region21
    $region20: #{tpu_custom_call.1} parent=1 // pred_region
      %s59 = ssub.s32 3072, 3072
      %60 = vsyncadd [#allocation9], %s59
      %s61 = sshll.u32 [#allocation8], 4
      %s62 = int_to_ptr.vmem [resolvable:$true] %s61
      %67 = dma.hbm_to_vmem [thread:$0]  %s4, 3072, %s62, [#allocation9], 64, 64, 4
    $region21: #{tpu_custom_call.1} parent=1 // pred_fallthru
      _
    // Predicated region
    $region22: #{tpu_custom_call.1} parent=1 // pred_check
      _
    $region23: #{tpu_custom_call.1} parent=1 // pred_check_branch
      %69 = sbr.rel (0) target = $region25
    $region24: #{tpu_custom_call.1} parent=1 // pred_region
      _
    $region25: #{tpu_custom_call.1} parent=1 // pred_fallthru
      _
    // Predicated region
    $region26: #{tpu_custom_call.1} parent=1 // pred_check
      _
    $region27: #{tpu_custom_call.1} parent=1 // pred_check_branch
      %71 = sbr.rel (0) target = $region29
    $region28: #{tpu_custom_call.1} parent=1 // pred_region
      %72 = dma.done [#allocation3], 3072
    $region29: #{tpu_custom_call.1} parent=1 // pred_fallthru
      _
    // Predicated region
    $region30: #{tpu_custom_call.1} parent=1 // pred_check
      _
    $region31: #{tpu_custom_call.1} parent=1 // pred_check_branch
      %74 = sbr.rel (0) target = $region33
    $region32: #{tpu_custom_call.1} parent=1 // pred_region
      %75 = dma.done [#allocation6], 1024
    $region33: #{tpu_custom_call.1} parent=1 // pred_fallthru
      _
    // Predicated region
    $region34: #{tpu_custom_call.1} parent=1 // pred_check
      _
    $region35: #{tpu_custom_call.1} parent=1 // pred_check_branch
      %77 = sbr.rel (0) target = $region37
    $region36: #{tpu_custom_call.1} parent=1 // pred_region
      %78 = dma.done [#allocation6], 3072
    $region37: #{tpu_custom_call.1} parent=1 // pred_fallthru
      _
    // Predicated region
    $region38: #{tpu_custom_call.1} parent=1 // pred_check
      _
    $region39: #{tpu_custom_call.1} parent=1 // pred_check_branch
      %80 = sbr.rel (0) target = $region41
    $region40: #{tpu_custom_call.1} parent=1 // pred_region
      %81 = dma.done [#allocation9], 3072
    $region41: #{tpu_custom_call.1} parent=1 // pred_fallthru
      _
    %v83 = vld [vmem:[#allocation5] sm:$0xf]
    %v84 = vld [vmem:[#allocation5 + $0x4] sm:$0xf]
    %v85 = vld [vmem:[#allocation5 + $0x8] sm:$0xf]
    %v86 = vld [vmem:[#allocation5 + $0xc] sm:$0xf]
    %v87 = vld [vmem:[#allocation5 + $0x10] sm:$0xf]
    %v88 = vld [vmem:[#allocation5 + $0x14] sm:$0xf]
    %v89 = vld [vmem:[#allocation5 + $0x18] sm:$0xf]
    %v90 = vld [vmem:[#allocation5 + $0x1c] sm:$0xf]
    %v91 = vld [vmem:[#allocation5 + $0x20] sm:$0xf]
    %v92 = vld [vmem:[#allocation5 + $0x24] sm:$0xf]
    %v93 = vld [vmem:[#allocation5 + $0x28] sm:$0xf]
    %v94 = vld [vmem:[#allocation5 + $0x2c] sm:$0xf]
    %v95 = vld [vmem:[#allocation5 + $0x30] sm:$0xf]
    %v96 = vld [vmem:[#allocation5 + $0x34] sm:$0xf]
    %v97 = vld [vmem:[#allocation5 + $0x38] sm:$0xf]
    %v98 = vld [vmem:[#allocation5 + $0x3c] sm:$0xf]
    %v99 = vld [vmem:[#allocation7] sm:$0xf]
    %v100 = vld [vmem:[#allocation7 + $0x4] sm:$0xf]
    %v101 = vld [vmem:[#allocation7 + $0x8] sm:$0xf]
    %v102 = vld [vmem:[#allocation7 + $0xc] sm:$0xf]
    %v103 = vld [vmem:[#allocation7 + $0x10] sm:$0xf]
    %v104 = vld [vmem:[#allocation7 + $0x14] sm:$0xf]
    %v105 = vld [vmem:[#allocation7 + $0x18] sm:$0xf]
    %v106 = vld [vmem:[#allocation7 + $0x1c] sm:$0xf]
    %v107 = vld [vmem:[#allocation7 + $0x20] sm:$0xf]
    %v108 = vld [vmem:[#allocation7 + $0x24] sm:$0xf]
    %v109 = vld [vmem:[#allocation7 + $0x28] sm:$0xf]
    %v110 = vld [vmem:[#allocation7 + $0x2c] sm:$0xf]
    %v111 = vld [vmem:[#allocation7 + $0x30] sm:$0xf]
    %v112 = vld [vmem:[#allocation7 + $0x34] sm:$0xf]
    %v113 = vld [vmem:[#allocation7 + $0x38] sm:$0xf]
    %v114 = vld [vmem:[#allocation7 + $0x3c] sm:$0xf]
    %v131 = vunpack.c.l.b16 %v83
    %v132 = vunpack.c.l.b16 %v84
    %v133 = vunpack.c.l.b16 %v85
    %v134 = vunpack.c.l.b16 %v86
    %v135 = vunpack.c.l.b16 %v87
    %v136 = vunpack.c.l.b16 %v88
    %v137 = vunpack.c.l.b16 %v89
    %v138 = vunpack.c.l.b16 %v90
    %v139 = vunpack.c.l.b16 %v91
    %v140 = vunpack.c.l.b16 %v92
    %v141 = vunpack.c.l.b16 %v93
    %v142 = vunpack.c.l.b16 %v94
    %v143 = vunpack.c.l.b16 %v95
    %v144 = vunpack.c.l.b16 %v96
    %v145 = vunpack.c.l.b16 %v97
    %v146 = vunpack.c.l.b16 %v98
    %v147 = vpack.c.b16 %v132, %v131
    %v148 = vpack.c.b16 %v134, %v133
    %v149 = vpack.c.b16 %v136, %v135
    %v150 = vpack.c.b16 %v138, %v137
    %v151 = vpack.c.b16 %v140, %v139
    %v152 = vpack.c.b16 %v142, %v141
    %v153 = vpack.c.b16 %v144, %v143
    %v154 = vpack.c.b16 %v146, %v145
    %v179 = vunpack.c.l.b16 %v99
    %v180 = vunpack.c.l.b16 %v100
    %v181 = vunpack.c.l.b16 %v101
    %v182 = vunpack.c.l.b16 %v102
    %v183 = vunpack.c.l.b16 %v103
    %v184 = vunpack.c.l.b16 %v104
    %v185 = vunpack.c.l.b16 %v105
    %v186 = vunpack.c.l.b16 %v106
    %v187 = vunpack.c.l.b16 %v107
    %v188 = vunpack.c.l.b16 %v108
    %v189 = vunpack.c.l.b16 %v109
    %v190 = vunpack.c.l.b16 %v110
    %v191 = vunpack.c.l.b16 %v111
    %v192 = vunpack.c.l.b16 %v112
    %v193 = vunpack.c.l.b16 %v113
    %v194 = vunpack.c.l.b16 %v114
    %v195 = vpack.c.b16 %v180, %v179
    %v196 = vpack.c.b16 %v182, %v181
    %v197 = vpack.c.b16 %v184, %v183
    %v198 = vpack.c.b16 %v186, %v185
    %v199 = vpack.c.b16 %v188, %v187
    %v200 = vpack.c.b16 %v190, %v189
    %v201 = vpack.c.b16 %v192, %v191
    %v202 = vpack.c.b16 %v194, %v193
    %211 = vmatprep.subr.bf16.mxu0 0
    %212 = vmatpush1.bf16.msra.mxu0 %v195
    %213 = vmatprep.subr.bf16.mxu0 0
    %214 = vmatpush1.bf16.msra.mxu0 %v196
    %215 = vmatprep.subr.bf16.mxu0 0
    %216 = vmatpush1.bf16.msra.mxu0 %v197
    %217 = vmatprep.subr.bf16.mxu0 0
    %218 = vmatpush1.bf16.msra.mxu0 %v198
    %219 = vmatprep.subr.bf16.mxu0 0
    %220 = vmatpush1.bf16.msra.mxu0 %v199
    %221 = vmatprep.subr.bf16.mxu0 0
    %222 = vmatpush1.bf16.msra.mxu0 %v200
    %223 = vmatprep.subr.bf16.mxu0 0
    %224 = vmatpush1.bf16.msra.mxu0 %v201
    %225 = vmatprep.subr.bf16.mxu0 0
    %226 = vmatpush1.bf16.msra.mxu0 %v202
    %227 = vmatprep.subr.bf16.mxu0 0
    %228 = vmatpush1.bf16.msra.mxu0 0
    %229 = vmatprep.subr.bf16.mxu0 0
    %230 = vmatpush1.bf16.msra.mxu0 0
    %231 = vmatprep.subr.bf16.mxu0 0
    %232 = vmatpush1.bf16.msra.mxu0 0
    %233 = vmatprep.subr.bf16.mxu0 0
    %234 = vmatpush1.bf16.msra.mxu0 0
    %235 = vmatprep.subr.bf16.mxu0 0
    %236 = vmatpush1.bf16.msra.mxu0 0
    %237 = vmatprep.subr.bf16.mxu0 0
    %238 = vmatpush1.bf16.msra.mxu0 0
    %239 = vmatprep.subr.bf16.mxu0 0
    %240 = vmatpush1.bf16.msra.mxu0 0
    %241 = vmatprep.subr.bf16.mxu0 0
    %242 = vmatpush1.bf16.msra.mxu0 0
    %243 = vmatprep.mubr.bf16.mxu0 0
    %244 = vmatmul.mubr.bf16.gmra.mrb[0].mxu0 %v147
    %v245 = vpop.f32.mrb[0].mxu0
    %v246 = vadd.f32 0.0, %v245
    %v247 = vpop.f32.mrb[0].mxu0
    %v248 = vpop.f32.mrb[0].mxu0
    %v249 = vadd.f32 0.0, %v248
    %v250 = vpop.f32.mrb[0].mxu0
    %251 = vmatprep.mubr.bf16.mxu0 0
    %252 = vmatmul.mubr.bf16.gmra.mrb[0].mxu0 %v148
    %v253 = vpop.f32.mrb[0].mxu0
    %v254 = vadd.f32 0.0, %v253
    %v255 = vpop.f32.mrb[0].mxu0
    %v256 = vpop.f32.mrb[0].mxu0
    %v257 = vadd.f32 0.0, %v256
    %v258 = vpop.f32.mrb[0].mxu0
    %259 = vmatprep.mubr.bf16.mxu0 0
    %260 = vmatmul.mubr.bf16.gmra.mrb[0].mxu0 %v149
    %v261 = vpop.f32.mrb[0].mxu0
    %v262 = vadd.f32 0.0, %v261
    %v263 = vpop.f32.mrb[0].mxu0
    %v264 = vpop.f32.mrb[0].mxu0
    %v265 = vadd.f32 0.0, %v264
    %v266 = vpop.f32.mrb[0].mxu0
    %267 = vmatprep.mubr.bf16.mxu0 0
    %268 = vmatmul.mubr.bf16.gmra.mrb[0].mxu0 %v150
    %v269 = vpop.f32.mrb[0].mxu0
    %v270 = vadd.f32 0.0, %v269
    %v271 = vpop.f32.mrb[0].mxu0
    %v272 = vpop.f32.mrb[0].mxu0
    %v273 = vadd.f32 0.0, %v272
    %v274 = vpop.f32.mrb[0].mxu0
    %275 = vmatprep.mubr.bf16.mxu0 0
    %276 = vmatmul.mubr.bf16.gmra.mrb[0].mxu0 %v151
    %v277 = vpop.f32.mrb[0].mxu0
    %v278 = vadd.f32 0.0, %v277
    %v279 = vpop.f32.mrb[0].mxu0
    %v280 = vpop.f32.mrb[0].mxu0
    %v281 = vadd.f32 0.0, %v280
    %v282 = vpop.f32.mrb[0].mxu0
    %283 = vmatprep.mubr.bf16.mxu0 0
    %284 = vmatmul.mubr.bf16.gmra.mrb[0].mxu0 %v152
    %v285 = vpop.f32.mrb[0].mxu0
    %v286 = vadd.f32 0.0, %v285
    %v287 = vpop.f32.mrb[0].mxu0
    %v288 = vpop.f32.mrb[0].mxu0
    %v289 = vadd.f32 0.0, %v288
    %v290 = vpop.f32.mrb[0].mxu0
    %291 = vmatprep.mubr.bf16.mxu0 0
    %292 = vmatmul.mubr.bf16.gmra.mrb[0].mxu0 %v153
    %v293 = vpop.f32.mrb[0].mxu0
    %v294 = vadd.f32 0.0, %v293
    %v295 = vpop.f32.mrb[0].mxu0
    %v296 = vpop.f32.mrb[0].mxu0
    %v297 = vadd.f32 0.0, %v296
    %v298 = vpop.f32.mrb[0].mxu0
    %299 = vmatprep.mubr.bf16.mxu0 0
    %300 = vmatmul.mubr.bf16.gmra.mrb[0].mxu0 %v154
    %v301 = vpop.f32.mrb[0].mxu0
    %v302 = vadd.f32 0.0, %v301
    %v303 = vpop.f32.mrb[0].mxu0
    %v304 = vpop.f32.mrb[0].mxu0
    %v305 = vadd.f32 0.0, %v304
    %v306 = vpop.f32.mrb[0].mxu0
    %307 = vdwg.mxu0
    %v308 = vpack.c.bf16 %v249, %v246
    %v309 = vpack.c.bf16 %v257, %v254
    %v310 = vpack.c.bf16 %v265, %v262
    %v311 = vpack.c.bf16 %v273, %v270
    %v312 = vpack.c.bf16 %v281, %v278
    %v313 = vpack.c.bf16 %v289, %v286
    %v314 = vpack.c.bf16 %v297, %v294
    %v315 = vpack.c.bf16 %v305, %v302
    %v316 = vld [vmem:[#allocation2] sm:$0xf]
    %v317 = vld [vmem:[#allocation2 + $0x4] sm:$0xf]
    %v318 = vld [vmem:[#allocation2 + $0x8] sm:$0xf]
    %v319 = vld [vmem:[#allocation2 + $0xc] sm:$0xf]
    %v320 = vld [vmem:[#allocation2 + $0x10] sm:$0xf]
    %v321 = vld [vmem:[#allocation2 + $0x14] sm:$0xf]
    %v322 = vld [vmem:[#allocation2 + $0x18] sm:$0xf]
    %v323 = vld [vmem:[#allocation2 + $0x1c] sm:$0xf]
    %v324 = vld [vmem:[#allocation2 + $0x20] sm:$0xf]
    %v325 = vld [vmem:[#allocation2 + $0x24] sm:$0xf]
    %v326 = vld [vmem:[#allocation2 + $0x28] sm:$0xf]
    %v327 = vld [vmem:[#allocation2 + $0x2c] sm:$0xf]
    %v328 = vld [vmem:[#allocation2 + $0x30] sm:$0xf]
    %v329 = vld [vmem:[#allocation2 + $0x34] sm:$0xf]
    %v330 = vld [vmem:[#allocation2 + $0x38] sm:$0xf]
    %v331 = vld [vmem:[#allocation2 + $0x3c] sm:$0xf]
    %s332 = scalar_lea.vmem [#allocation7], 64
    %v333 = vld [vmem:[%s332] sm:$0xf]
    %v334 = vld [vmem:[%s332 + $0x4] sm:$0xf]
    %v335 = vld [vmem:[%s332 + $0x8] sm:$0xf]
    %v336 = vld [vmem:[%s332 + $0xc] sm:$0xf]
    %v337 = vld [vmem:[%s332 + $0x10] sm:$0xf]
    %v338 = vld [vmem:[%s332 + $0x14] sm:$0xf]
    %v339 = vld [vmem:[%s332 + $0x18] sm:$0xf]
    %v340 = vld [vmem:[%s332 + $0x1c] sm:$0xf]
    %v341 = vld [vmem:[%s332 + $0x20] sm:$0xf]
    %v342 = vld [vmem:[%s332 + $0x24] sm:$0xf]
    %v343 = vld [vmem:[%s332 + $0x28] sm:$0xf]
    %v344 = vld [vmem:[%s332 + $0x2c] sm:$0xf]
    %v345 = vld [vmem:[%s332 + $0x30] sm:$0xf]
    %v346 = vld [vmem:[%s332 + $0x34] sm:$0xf]
    %v347 = vld [vmem:[%s332 + $0x38] sm:$0xf]
    %v348 = vld [vmem:[%s332 + $0x3c] sm:$0xf]
    %v365 = vunpack.c.l.b16 %v333
    %v366 = vunpack.c.l.b16 %v334
    %v367 = vunpack.c.l.b16 %v335
    %v368 = vunpack.c.l.b16 %v336
    %v369 = vunpack.c.l.b16 %v337
    %v370 = vunpack.c.l.b16 %v338
    %v371 = vunpack.c.l.b16 %v339
    %v372 = vunpack.c.l.b16 %v340
    %v373 = vunpack.c.l.b16 %v341
    %v374 = vunpack.c.l.b16 %v342
    %v375 = vunpack.c.l.b16 %v343
    %v376 = vunpack.c.l.b16 %v344
    %v377 = vunpack.c.l.b16 %v345
    %v378 = vunpack.c.l.b16 %v346
    %v379 = vunpack.c.l.b16 %v347
    %v380 = vunpack.c.l.b16 %v348
    %v381 = vpack.c.b16 %v366, %v365
    %v382 = vpack.c.b16 %v368, %v367
    %v383 = vpack.c.b16 %v370, %v369
    %v384 = vpack.c.b16 %v372, %v371
    %v385 = vpack.c.b16 %v374, %v373
    %v386 = vpack.c.b16 %v376, %v375
    %v387 = vpack.c.b16 %v378, %v377
    %v388 = vpack.c.b16 %v380, %v379
    %397 = vmatprep.subr.bf16.mxu0 0
    %398 = vmatpush1.bf16.msra.mxu0 %v381
    %399 = vmatprep.subr.bf16.mxu0 0
    %400 = vmatpush1.bf16.msra.mxu0 %v382
    %401 = vmatprep.subr.bf16.mxu0 0
    %402 = vmatpush1.bf16.msra.mxu0 %v383
    %403 = vmatprep.subr.bf16.mxu0 0
    %404 = vmatpush1.bf16.msra.mxu0 %v384
    %405 = vmatprep.subr.bf16.mxu0 0
    %406 = vmatpush1.bf16.msra.mxu0 %v385
    %407 = vmatprep.subr.bf16.mxu0 0
    %408 = vmatpush1.bf16.msra.mxu0 %v386
    %409 = vmatprep.subr.bf16.mxu0 0
    %410 = vmatpush1.bf16.msra.mxu0 %v387
    %411 = vmatprep.subr.bf16.mxu0 0
    %412 = vmatpush1.bf16.msra.mxu0 %v388
    %413 = vmatprep.subr.bf16.mxu0 0
    %414 = vmatpush1.bf16.msra.mxu0 0
    %415 = vmatprep.subr.bf16.mxu0 0
    %416 = vmatpush1.bf16.msra.mxu0 0
    %417 = vmatprep.subr.bf16.mxu0 0
    %418 = vmatpush1.bf16.msra.mxu0 0
    %419 = vmatprep.subr.bf16.mxu0 0
    %420 = vmatpush1.bf16.msra.mxu0 0
    %421 = vmatprep.subr.bf16.mxu0 0
    %422 = vmatpush1.bf16.msra.mxu0 0
    %423 = vmatprep.subr.bf16.mxu0 0
    %424 = vmatpush1.bf16.msra.mxu0 0
    %425 = vmatprep.subr.bf16.mxu0 0
    %426 = vmatpush1.bf16.msra.mxu0 0
    %427 = vmatprep.subr.bf16.mxu0 0
    %428 = vmatpush1.bf16.msra.mxu0 0
    %429 = vmatprep.mubr.bf16.mxu0 0
    %430 = vmatmul.mubr.bf16.gmra.mrb[0].mxu0 %v147
    %v431 = vpop.f32.mrb[0].mxu0
    %v432 = vadd.f32 0.0, %v431
    %v433 = vpop.f32.mrb[0].mxu0
    %v434 = vpop.f32.mrb[0].mxu0
    %v435 = vadd.f32 0.0, %v434
    %v436 = vpop.f32.mrb[0].mxu0
    %437 = vmatprep.mubr.bf16.mxu0 0
    %438 = vmatmul.mubr.bf16.gmra.mrb[0].mxu0 %v148
    %v439 = vpop.f32.mrb[0].mxu0
    %v440 = vadd.f32 0.0, %v439
    %v441 = vpop.f32.mrb[0].mxu0
    %v442 = vpop.f32.mrb[0].mxu0
    %v443 = vadd.f32 0.0, %v442
    %v444 = vpop.f32.mrb[0].mxu0
    %445 = vmatprep.mubr.bf16.mxu0 0
    %446 = vmatmul.mubr.bf16.gmra.mrb[0].mxu0 %v149
    %v447 = vpop.f32.mrb[0].mxu0
    %v448 = vadd.f32 0.0, %v447
    %v449 = vpop.f32.mrb[0].mxu0
    %v450 = vpop.f32.mrb[0].mxu0
    %v451 = vadd.f32 0.0, %v450
    %v452 = vpop.f32.mrb[0].mxu0
    %453 = vmatprep.mubr.bf16.mxu0 0
    %454 = vmatmul.mubr.bf16.gmra.mrb[0].mxu0 %v150
    %v455 = vpop.f32.mrb[0].mxu0
    %v456 = vadd.f32 0.0, %v455
    %v457 = vpop.f32.mrb[0].mxu0
    %v458 = vpop.f32.mrb[0].mxu0
    %v459 = vadd.f32 0.0, %v458
    %v460 = vpop.f32.mrb[0].mxu0
    %461 = vmatprep.mubr.bf16.mxu0 0
    %462 = vmatmul.mubr.bf16.gmra.mrb[0].mxu0 %v151
    %v463 = vpop.f32.mrb[0].mxu0
    %v464 = vadd.f32 0.0, %v463
    %v465 = vpop.f32.mrb[0].mxu0
    %v466 = vpop.f32.mrb[0].mxu0
    %v467 = vadd.f32 0.0, %v466
    %v468 = vpop.f32.mrb[0].mxu0
    %469 = vmatprep.mubr.bf16.mxu0 0
    %470 = vmatmul.mubr.bf16.gmra.mrb[0].mxu0 %v152
    %v471 = vpop.f32.mrb[0].mxu0
    %v472 = vadd.f32 0.0, %v471
    %v473 = vpop.f32.mrb[0].mxu0
    %v474 = vpop.f32.mrb[0].mxu0
    %v475 = vadd.f32 0.0, %v474
    %v476 = vpop.f32.mrb[0].mxu0
    %477 = vmatprep.mubr.bf16.mxu0 0
    %478 = vmatmul.mubr.bf16.gmra.mrb[0].mxu0 %v153
    %v479 = vpop.f32.mrb[0].mxu0
    %v480 = vadd.f32 0.0, %v479
    %v481 = vpop.f32.mrb[0].mxu0
    %v482 = vpop.f32.mrb[0].mxu0
    %v483 = vadd.f32 0.0, %v482
    %v484 = vpop.f32.mrb[0].mxu0
    %485 = vmatprep.mubr.bf16.mxu0 0
    %486 = vmatmul.mubr.bf16.gmra.mrb[0].mxu0 %v154
    %v487 = vpop.f32.mrb[0].mxu0
    %v488 = vadd.f32 0.0, %v487
    %v489 = vpop.f32.mrb[0].mxu0
    %v490 = vpop.f32.mrb[0].mxu0
    %v491 = vadd.f32 0.0, %v490
    %v492 = vpop.f32.mrb[0].mxu0
    %493 = vdwg.mxu0
    %v494 = vpack.c.bf16 %v435, %v432
    %v495 = vpack.c.bf16 %v443, %v440
    %v496 = vpack.c.bf16 %v451, %v448
    %v497 = vpack.c.bf16 %v459, %v456
    %v498 = vpack.c.bf16 %v467, %v464
    %v499 = vpack.c.bf16 %v475, %v472
    %v500 = vpack.c.bf16 %v483, %v480
    %v501 = vpack.c.bf16 %v491, %v488
    %s502 = scalar_lea.vmem [#allocation2], 64
    %v503 = vld [vmem:[%s502] sm:$0xf]
    %v504 = vld [vmem:[%s502 + $0x4] sm:$0xf]
    %v505 = vld [vmem:[%s502 + $0x8] sm:$0xf]
    %v506 = vld [vmem:[%s502 + $0xc] sm:$0xf]
    %v507 = vld [vmem:[%s502 + $0x10] sm:$0xf]
    %v508 = vld [vmem:[%s502 + $0x14] sm:$0xf]
    %v509 = vld [vmem:[%s502 + $0x18] sm:$0xf]
    %v510 = vld [vmem:[%s502 + $0x1c] sm:$0xf]
    %v511 = vld [vmem:[%s502 + $0x20] sm:$0xf]
    %v512 = vld [vmem:[%s502 + $0x24] sm:$0xf]
    %v513 = vld [vmem:[%s502 + $0x28] sm:$0xf]
    %v514 = vld [vmem:[%s502 + $0x2c] sm:$0xf]
    %v515 = vld [vmem:[%s502 + $0x30] sm:$0xf]
    %v516 = vld [vmem:[%s502 + $0x34] sm:$0xf]
    %v517 = vld [vmem:[%s502 + $0x38] sm:$0xf]
    %v518 = vld [vmem:[%s502 + $0x3c] sm:$0xf]
    %v535 = vunpack.c.l.b16 %v503
    %v536 = vunpack.c.l.b16 %v504
    %v537 = vunpack.c.l.b16 %v505
    %v538 = vunpack.c.l.b16 %v506
    %v539 = vunpack.c.l.b16 %v507
    %v540 = vunpack.c.l.b16 %v508
    %v541 = vunpack.c.l.b16 %v509
    %v542 = vunpack.c.l.b16 %v510
    %v543 = vunpack.c.l.b16 %v511
    %v544 = vunpack.c.l.b16 %v512
    %v545 = vunpack.c.l.b16 %v513
    %v546 = vunpack.c.l.b16 %v514
    %v547 = vunpack.c.l.b16 %v515
    %v548 = vunpack.c.l.b16 %v516
    %v549 = vunpack.c.l.b16 %v517
    %v550 = vunpack.c.l.b16 %v518
    %v551 = vpack.c.b16 %v536, %v535
    %v552 = vpack.c.b16 %v538, %v537
    %v553 = vpack.c.b16 %v540, %v539
    %v554 = vpack.c.b16 %v542, %v541
    %v555 = vpack.c.b16 %v544, %v543
    %v556 = vpack.c.b16 %v546, %v545
    %v557 = vpack.c.b16 %v548, %v547
    %v558 = vpack.c.b16 %v550, %v549
    %567 = vmatprep.subr.bf16.mxu0 0
    %568 = vmatpush1.bf16.msra.mxu0 %v494
    %569 = vmatprep.subr.bf16.mxu0 0
    %570 = vmatpush1.bf16.msra.mxu0 %v495
    %571 = vmatprep.subr.bf16.mxu0 0
    %572 = vmatpush1.bf16.msra.mxu0 %v496
    %573 = vmatprep.subr.bf16.mxu0 0
    %574 = vmatpush1.bf16.msra.mxu0 %v497
    %575 = vmatprep.subr.bf16.mxu0 0
    %576 = vmatpush1.bf16.msra.mxu0 %v498
    %577 = vmatprep.subr.bf16.mxu0 0
    %578 = vmatpush1.bf16.msra.mxu0 %v499
    %579 = vmatprep.subr.bf16.mxu0 0
    %580 = vmatpush1.bf16.msra.mxu0 %v500
    %581 = vmatprep.subr.bf16.mxu0 0
    %582 = vmatpush1.bf16.msra.mxu0 %v501
    %583 = vmatprep.subr.bf16.mxu0 0
    %584 = vmatpush1.bf16.msra.mxu0 0
    %585 = vmatprep.subr.bf16.mxu0 0
    %586 = vmatpush1.bf16.msra.mxu0 0
    %587 = vmatprep.subr.bf16.mxu0 0
    %588 = vmatpush1.bf16.msra.mxu0 0
    %589 = vmatprep.subr.bf16.mxu0 0
    %590 = vmatpush1.bf16.msra.mxu0 0
    %591 = vmatprep.subr.bf16.mxu0 0
    %592 = vmatpush1.bf16.msra.mxu0 0
    %593 = vmatprep.subr.bf16.mxu0 0
    %594 = vmatpush1.bf16.msra.mxu0 0
    %595 = vmatprep.subr.bf16.mxu0 0
    %596 = vmatpush1.bf16.msra.mxu0 0
    %597 = vmatprep.subr.bf16.mxu0 0
    %598 = vmatpush1.bf16.msra.mxu0 0
    %599 = vmatprep.mubr.bf16.mxu0 0
    %600 = vmatmul.mubr.bf16.gmra.mrb[0].mxu0 %v551
    %v601 = vpop.f32.mrb[0].mxu0
    %v602 = vadd.f32 0.0, %v601
    %v603 = vpop.f32.mrb[0].mxu0
    %v604 = vpop.f32.mrb[0].mxu0
    %v605 = vadd.f32 0.0, %v604
    %v606 = vpop.f32.mrb[0].mxu0
    %607 = vmatprep.mubr.bf16.mxu0 0
    %608 = vmatmul.mubr.bf16.gmra.mrb[0].mxu0 %v552
    %v609 = vpop.f32.mrb[0].mxu0
    %v610 = vadd.f32 0.0, %v609
    %v611 = vpop.f32.mrb[0].mxu0
    %v612 = vpop.f32.mrb[0].mxu0
    %v613 = vadd.f32 0.0, %v612
    %v614 = vpop.f32.mrb[0].mxu0
    %615 = vmatprep.mubr.bf16.mxu0 0
    %616 = vmatmul.mubr.bf16.gmra.mrb[0].mxu0 %v553
    %v617 = vpop.f32.mrb[0].mxu0
    %v618 = vadd.f32 0.0, %v617
    %v619 = vpop.f32.mrb[0].mxu0
    %v620 = vpop.f32.mrb[0].mxu0
    %v621 = vadd.f32 0.0, %v620
    %v622 = vpop.f32.mrb[0].mxu0
    %623 = vmatprep.mubr.bf16.mxu0 0
    %624 = vmatmul.mubr.bf16.gmra.mrb[0].mxu0 %v554
    %v625 = vpop.f32.mrb[0].mxu0
    %v626 = vadd.f32 0.0, %v625
    %v627 = vpop.f32.mrb[0].mxu0
    %v628 = vpop.f32.mrb[0].mxu0
    %v629 = vadd.f32 0.0, %v628
    %v630 = vpop.f32.mrb[0].mxu0
    %631 = vmatprep.mubr.bf16.mxu0 0
    %632 = vmatmul.mubr.bf16.gmra.mrb[0].mxu0 %v555
    %v633 = vpop.f32.mrb[0].mxu0
    %v634 = vadd.f32 0.0, %v633
    %v635 = vpop.f32.mrb[0].mxu0
    %v636 = vpop.f32.mrb[0].mxu0
    %v637 = vadd.f32 0.0, %v636
    %v638 = vpop.f32.mrb[0].mxu0
    %639 = vmatprep.mubr.bf16.mxu0 0
    %640 = vmatmul.mubr.bf16.gmra.mrb[0].mxu0 %v556
    %v641 = vpop.f32.mrb[0].mxu0
    %v642 = vadd.f32 0.0, %v641
    %v643 = vpop.f32.mrb[0].mxu0
    %v644 = vpop.f32.mrb[0].mxu0
    %v645 = vadd.f32 0.0, %v644
    %v646 = vpop.f32.mrb[0].mxu0
    %647 = vmatprep.mubr.bf16.mxu0 0
    %648 = vmatmul.mubr.bf16.gmra.mrb[0].mxu0 %v557
    %v649 = vpop.f32.mrb[0].mxu0
    %v650 = vadd.f32 0.0, %v649
    %v651 = vpop.f32.mrb[0].mxu0
    %v652 = vpop.f32.mrb[0].mxu0
    %v653 = vadd.f32 0.0, %v652
    %v654 = vpop.f32.mrb[0].mxu0
    %655 = vmatprep.mubr.bf16.mxu0 0
    %656 = vmatmul.mubr.bf16.gmra.mrb[0].mxu0 %v558
    %v657 = vpop.f32.mrb[0].mxu0
    %v658 = vadd.f32 0.0, %v657
    %v659 = vpop.f32.mrb[0].mxu0
    %v660 = vpop.f32.mrb[0].mxu0
    %v661 = vadd.f32 0.0, %v660
    %v662 = vpop.f32.mrb[0].mxu0
    %663 = vdwg.mxu0
    %v680 = vunpack.c.l.b16 %v316
    %v681 = vunpack.c.l.b16 %v317
    %v682 = vunpack.c.l.b16 %v318
    %v683 = vunpack.c.l.b16 %v319
    %v684 = vunpack.c.l.b16 %v320
    %v685 = vunpack.c.l.b16 %v321
    %v686 = vunpack.c.l.b16 %v322
    %v687 = vunpack.c.l.b16 %v323
    %v688 = vunpack.c.l.b16 %v324
    %v689 = vunpack.c.l.b16 %v325
    %v690 = vunpack.c.l.b16 %v326
    %v691 = vunpack.c.l.b16 %v327
    %v692 = vunpack.c.l.b16 %v328
    %v693 = vunpack.c.l.b16 %v329
    %v694 = vunpack.c.l.b16 %v330
    %v695 = vunpack.c.l.b16 %v331
    %v696 = vpack.c.b16 %v681, %v680
    %v697 = vpack.c.b16 %v683, %v682
    %v698 = vpack.c.b16 %v685, %v684
    %v699 = vpack.c.b16 %v687, %v686
    %v700 = vpack.c.b16 %v689, %v688
    %v701 = vpack.c.b16 %v691, %v690
    %v702 = vpack.c.b16 %v693, %v692
    %v703 = vpack.c.b16 %v695, %v694
    %712 = vmatprep.subr.bf16.mxu0 0
    %713 = vmatpush1.bf16.msra.mxu0 %v308
    %714 = vmatprep.subr.bf16.mxu0 0
    %715 = vmatpush1.bf16.msra.mxu0 %v309
    %716 = vmatprep.subr.bf16.mxu0 0
    %717 = vmatpush1.bf16.msra.mxu0 %v310
    %718 = vmatprep.subr.bf16.mxu0 0
    %719 = vmatpush1.bf16.msra.mxu0 %v311
    %720 = vmatprep.subr.bf16.mxu0 0
    %721 = vmatpush1.bf16.msra.mxu0 %v312
    %722 = vmatprep.subr.bf16.mxu0 0
    %723 = vmatpush1.bf16.msra.mxu0 %v313
    %724 = vmatprep.subr.bf16.mxu0 0
    %725 = vmatpush1.bf16.msra.mxu0 %v314
    %726 = vmatprep.subr.bf16.mxu0 0
    %727 = vmatpush1.bf16.msra.mxu0 %v315
    %728 = vmatprep.subr.bf16.mxu0 0
    %729 = vmatpush1.bf16.msra.mxu0 0
    %730 = vmatprep.subr.bf16.mxu0 0
    %731 = vmatpush1.bf16.msra.mxu0 0
    %732 = vmatprep.subr.bf16.mxu0 0
    %733 = vmatpush1.bf16.msra.mxu0 0
    %734 = vmatprep.subr.bf16.mxu0 0
    %735 = vmatpush1.bf16.msra.mxu0 0
    %736 = vmatprep.subr.bf16.mxu0 0
    %737 = vmatpush1.bf16.msra.mxu0 0
    %738 = vmatprep.subr.bf16.mxu0 0
    %739 = vmatpush1.bf16.msra.mxu0 0
    %740 = vmatprep.subr.bf16.mxu0 0
    %741 = vmatpush1.bf16.msra.mxu0 0
    %742 = vmatprep.subr.bf16.mxu0 0
    %743 = vmatpush1.bf16.msra.mxu0 0
    %744 = vmatprep.mubr.bf16.mxu0 0
    %745 = vmatmul.mubr.bf16.gmra.mrb[0].mxu0 %v696
    %v746 = vpop.f32.mrb[0].mxu0
    %v747 = vadd.f32 %v602, %v746
    %v748 = vpop.f32.mrb[0].mxu0
    %v749 = vpop.f32.mrb[0].mxu0
    %v750 = vadd.f32 %v605, %v749
    %v751 = vpop.f32.mrb[0].mxu0
    %752 = vmatprep.mubr.bf16.mxu0 0
    %753 = vmatmul.mubr.bf16.gmra.mrb[0].mxu0 %v697
    %v754 = vpop.f32.mrb[0].mxu0
    %v755 = vadd.f32 %v610, %v754
    %v756 = vpop.f32.mrb[0].mxu0
    %v757 = vpop.f32.mrb[0].mxu0
    %v758 = vadd.f32 %v613, %v757
    %v759 = vpop.f32.mrb[0].mxu0
    %760 = vmatprep.mubr.bf16.mxu0 0
    %761 = vmatmul.mubr.bf16.gmra.mrb[0].mxu0 %v698
    %v762 = vpop.f32.mrb[0].mxu0
    %v763 = vadd.f32 %v618, %v762
    %v764 = vpop.f32.mrb[0].mxu0
    %v765 = vpop.f32.mrb[0].mxu0
    %v766 = vadd.f32 %v621, %v765
    %v767 = vpop.f32.mrb[0].mxu0
    %768 = vmatprep.mubr.bf16.mxu0 0
    %769 = vmatmul.mubr.bf16.gmra.mrb[0].mxu0 %v699
    %v770 = vpop.f32.mrb[0].mxu0
    %v771 = vadd.f32 %v626, %v770
    %v772 = vpop.f32.mrb[0].mxu0
    %v773 = vpop.f32.mrb[0].mxu0
    %v774 = vadd.f32 %v629, %v773
    %v775 = vpop.f32.mrb[0].mxu0
    %776 = vmatprep.mubr.bf16.mxu0 0
    %777 = vmatmul.mubr.bf16.gmra.mrb[0].mxu0 %v700
    %v778 = vpop.f32.mrb[0].mxu0
    %v779 = vadd.f32 %v634, %v778
    %v780 = vpop.f32.mrb[0].mxu0
    %v781 = vpop.f32.mrb[0].mxu0
    %v782 = vadd.f32 %v637, %v781
    %v783 = vpop.f32.mrb[0].mxu0
    %784 = vmatprep.mubr.bf16.mxu0 0
    %785 = vmatmul.mubr.bf16.gmra.mrb[0].mxu0 %v701
    %v786 = vpop.f32.mrb[0].mxu0
    %v787 = vadd.f32 %v642, %v786
    %v788 = vpop.f32.mrb[0].mxu0
    %v789 = vpop.f32.mrb[0].mxu0
    %v790 = vadd.f32 %v645, %v789
    %v791 = vpop.f32.mrb[0].mxu0
    %792 = vmatprep.mubr.bf16.mxu0 0
    %793 = vmatmul.mubr.bf16.gmra.mrb[0].mxu0 %v702
    %v794 = vpop.f32.mrb[0].mxu0
    %v795 = vadd.f32 %v650, %v794
    %v796 = vpop.f32.mrb[0].mxu0
    %v797 = vpop.f32.mrb[0].mxu0
    %v798 = vadd.f32 %v653, %v797
    %v799 = vpop.f32.mrb[0].mxu0
    %800 = vmatprep.mubr.bf16.mxu0 0
    %801 = vmatmul.mubr.bf16.gmra.mrb[0].mxu0 %v703
    %v802 = vpop.f32.mrb[0].mxu0
    %v803 = vadd.f32 %v658, %v802
    %v804 = vpop.f32.mrb[0].mxu0
    %v805 = vpop.f32.mrb[0].mxu0
    %v806 = vadd.f32 %v661, %v805
    %v807 = vpop.f32.mrb[0].mxu0
    %808 = vdwg.mxu0
    %s809 = scalar_lea.vmem [#allocation7], 128
    %v810 = vld [vmem:[%s809] sm:$0xf]
    %v811 = vld [vmem:[%s809 + $0x4] sm:$0xf]
    %v812 = vld [vmem:[%s809 + $0x8] sm:$0xf]
    %v813 = vld [vmem:[%s809 + $0xc] sm:$0xf]
    %v814 = vld [vmem:[%s809 + $0x10] sm:$0xf]
    %v815 = vld [vmem:[%s809 + $0x14] sm:$0xf]
    %v816 = vld [vmem:[%s809 + $0x18] sm:$0xf]
    %v817 = vld [vmem:[%s809 + $0x1c] sm:$0xf]
    %v818 = vld [vmem:[%s809 + $0x20] sm:$0xf]
    %v819 = vld [vmem:[%s809 + $0x24] sm:$0xf]
    %v820 = vld [vmem:[%s809 + $0x28] sm:$0xf]
    %v821 = vld [vmem:[%s809 + $0x2c] sm:$0xf]
    %v822 = vld [vmem:[%s809 + $0x30] sm:$0xf]
    %v823 = vld [vmem:[%s809 + $0x34] sm:$0xf]
    %v824 = vld [vmem:[%s809 + $0x38] sm:$0xf]
    %v825 = vld [vmem:[%s809 + $0x3c] sm:$0xf]
    %v842 = vunpack.c.l.b16 %v810
    %v843 = vunpack.c.l.b16 %v811
    %v844 = vunpack.c.l.b16 %v812
    %v845 = vunpack.c.l.b16 %v813
    %v846 = vunpack.c.l.b16 %v814
    %v847 = vunpack.c.l.b16 %v815
    %v848 = vunpack.c.l.b16 %v816
    %v849 = vunpack.c.l.b16 %v817
    %v850 = vunpack.c.l.b16 %v818
    %v851 = vunpack.c.l.b16 %v819
    %v852 = vunpack.c.l.b16 %v820
    %v853 = vunpack.c.l.b16 %v821
    %v854 = vunpack.c.l.b16 %v822
    %v855 = vunpack.c.l.b16 %v823
    %v856 = vunpack.c.l.b16 %v824
    %v857 = vunpack.c.l.b16 %v825
    %v858 = vpack.c.b16 %v843, %v842
    %v859 = vpack.c.b16 %v845, %v844
    %v860 = vpack.c.b16 %v847, %v846
    %v861 = vpack.c.b16 %v849, %v848
    %v862 = vpack.c.b16 %v851, %v850
    %v863 = vpack.c.b16 %v853, %v852
    %v864 = vpack.c.b16 %v855, %v854
    %v865 = vpack.c.b16 %v857, %v856
    %874 = vmatprep.subr.bf16.mxu0 0
    %875 = vmatpush1.bf16.msra.mxu0 %v858
    %876 = vmatprep.subr.bf16.mxu0 0
    %877 = vmatpush1.bf16.msra.mxu0 %v859
    %878 = vmatprep.subr.bf16.mxu0 0
    %879 = vmatpush1.bf16.msra.mxu0 %v860
    %880 = vmatprep.subr.bf16.mxu0 0
    %881 = vmatpush1.bf16.msra.mxu0 %v861
    %882 = vmatprep.subr.bf16.mxu0 0
    %883 = vmatpush1.bf16.msra.mxu0 %v862
    %884 = vmatprep.subr.bf16.mxu0 0
    %885 = vmatpush1.bf16.msra.mxu0 %v863
    %886 = vmatprep.subr.bf16.mxu0 0
    %887 = vmatpush1.bf16.msra.mxu0 %v864
    %888 = vmatprep.subr.bf16.mxu0 0
    %889 = vmatpush1.bf16.msra.mxu0 %v865
    %890 = vmatprep.subr.bf16.mxu0 0
    %891 = vmatpush1.bf16.msra.mxu0 0
    %892 = vmatprep.subr.bf16.mxu0 0
    %893 = vmatpush1.bf16.msra.mxu0 0
    %894 = vmatprep.subr.bf16.mxu0 0
    %895 = vmatpush1.bf16.msra.mxu0 0
    %896 = vmatprep.subr.bf16.mxu0 0
    %897 = vmatpush1.bf16.msra.mxu0 0
    %898 = vmatprep.subr.bf16.mxu0 0
    %899 = vmatpush1.bf16.msra.mxu0 0
    %900 = vmatprep.subr.bf16.mxu0 0
    %901 = vmatpush1.bf16.msra.mxu0 0
    %902 = vmatprep.subr.bf16.mxu0 0
    %903 = vmatpush1.bf16.msra.mxu0 0
    %904 = vmatprep.subr.bf16.mxu0 0
    %905 = vmatpush1.bf16.msra.mxu0 0
    %906 = vmatprep.mubr.bf16.mxu0 0
    %907 = vmatmul.mubr.bf16.gmra.mrb[0].mxu0 %v147
    %v908 = vpop.f32.mrb[0].mxu0
    %v909 = vadd.f32 0.0, %v908
    %v910 = vpop.f32.mrb[0].mxu0
    %v911 = vpop.f32.mrb[0].mxu0
    %v912 = vadd.f32 0.0, %v911
    %v913 = vpop.f32.mrb[0].mxu0
    %914 = vmatprep.mubr.bf16.mxu0 0
    %915 = vmatmul.mubr.bf16.gmra.mrb[0].mxu0 %v148
    %v916 = vpop.f32.mrb[0].mxu0
    %v917 = vadd.f32 0.0, %v916
    %v918 = vpop.f32.mrb[0].mxu0
    %v919 = vpop.f32.mrb[0].mxu0
    %v920 = vadd.f32 0.0, %v919
    %v921 = vpop.f32.mrb[0].mxu0
    %922 = vmatprep.mubr.bf16.mxu0 0
    %923 = vmatmul.mubr.bf16.gmra.mrb[0].mxu0 %v149
    %v924 = vpop.f32.mrb[0].mxu0
    %v925 = vadd.f32 0.0, %v924
    %v926 = vpop.f32.mrb[0].mxu0
    %v927 = vpop.f32.mrb[0].mxu0
    %v928 = vadd.f32 0.0, %v927
    %v929 = vpop.f32.mrb[0].mxu0
    %930 = vmatprep.mubr.bf16.mxu0 0
    %931 = vmatmul.mubr.bf16.gmra.mrb[0].mxu0 %v150
    %v932 = vpop.f32.mrb[0].mxu0
    %v933 = vadd.f32 0.0, %v932
    %v934 = vpop.f32.mrb[0].mxu0
    %v935 = vpop.f32.mrb[0].mxu0
    %v936 = vadd.f32 0.0, %v935
    %v937 = vpop.f32.mrb[0].mxu0
    %938 = vmatprep.mubr.bf16.mxu0 0
    %939 = vmatmul.mubr.bf16.gmra.mrb[0].mxu0 %v151
    %v940 = vpop.f32.mrb[0].mxu0
    %v941 = vadd.f32 0.0, %v940
    %v942 = vpop.f32.mrb[0].mxu0
    %v943 = vpop.f32.mrb[0].mxu0
    %v944 = vadd.f32 0.0, %v943
    %v945 = vpop.f32.mrb[0].mxu0
    %946 = vmatprep.mubr.bf16.mxu0 0
    %947 = vmatmul.mubr.bf16.gmra.mrb[0].mxu0 %v152
    %v948 = vpop.f32.mrb[0].mxu0
    %v949 = vadd.f32 0.0, %v948
    %v950 = vpop.f32.mrb[0].mxu0
    %v951 = vpop.f32.mrb[0].mxu0
    %v952 = vadd.f32 0.0, %v951
    %v953 = vpop.f32.mrb[0].mxu0
    %954 = vmatprep.mubr.bf16.mxu0 0
    %955 = vmatmul.mubr.bf16.gmra.mrb[0].mxu0 %v153
    %v956 = vpop.f32.mrb[0].mxu0
    %v957 = vadd.f32 0.0, %v956
    %v958 = vpop.f32.mrb[0].mxu0
    %v959 = vpop.f32.mrb[0].mxu0
    %v960 = vadd.f32 0.0, %v959
    %v961 = vpop.f32.mrb[0].mxu0
    %962 = vmatprep.mubr.bf16.mxu0 0
    %963 = vmatmul.mubr.bf16.gmra.mrb[0].mxu0 %v154
    %v964 = vpop.f32.mrb[0].mxu0
    %v965 = vadd.f32 0.0, %v964
    %v966 = vpop.f32.mrb[0].mxu0
    %v967 = vpop.f32.mrb[0].mxu0
    %v968 = vadd.f32 0.0, %v967
    %v969 = vpop.f32.mrb[0].mxu0
    %970 = vdwg.mxu0
    %v971 = vpack.c.bf16 %v912, %v909
    %v972 = vpack.c.bf16 %v920, %v917
    %v973 = vpack.c.bf16 %v928, %v925
    %v974 = vpack.c.bf16 %v936, %v933
    %v975 = vpack.c.bf16 %v944, %v941
    %v976 = vpack.c.bf16 %v952, %v949
    %v977 = vpack.c.bf16 %v960, %v957
    %v978 = vpack.c.bf16 %v968, %v965
    %s979 = scalar_lea.vmem [#allocation2], 128
    %v980 = vld [vmem:[%s979] sm:$0xf]
    %v981 = vld [vmem:[%s979 + $0x4] sm:$0xf]
    %v982 = vld [vmem:[%s979 + $0x8] sm:$0xf]
    %v983 = vld [vmem:[%s979 + $0xc] sm:$0xf]
    %v984 = vld [vmem:[%s979 + $0x10] sm:$0xf]
    %v985 = vld [vmem:[%s979 + $0x14] sm:$0xf]
    %v986 = vld [vmem:[%s979 + $0x18] sm:$0xf]
    %v987 = vld [vmem:[%s979 + $0x1c] sm:$0xf]
    %v988 = vld [vmem:[%s979 + $0x20] sm:$0xf]
    %v989 = vld [vmem:[%s979 + $0x24] sm:$0xf]
    %v990 = vld [vmem:[%s979 + $0x28] sm:$0xf]
    %v991 = vld [vmem:[%s979 + $0x2c] sm:$0xf]
    %v992 = vld [vmem:[%s979 + $0x30] sm:$0xf]
    %v993 = vld [vmem:[%s979 + $0x34] sm:$0xf]
    %v994 = vld [vmem:[%s979 + $0x38] sm:$0xf]
    %v995 = vld [vmem:[%s979 + $0x3c] sm:$0xf]
    %v1012 = vunpack.c.l.b16 %v980
    %v1013 = vunpack.c.l.b16 %v981
    %v1014 = vunpack.c.l.b16 %v982
    %v1015 = vunpack.c.l.b16 %v983
    %v1016 = vunpack.c.l.b16 %v984
    %v1017 = vunpack.c.l.b16 %v985
    %v1018 = vunpack.c.l.b16 %v986
    %v1019 = vunpack.c.l.b16 %v987
    %v1020 = vunpack.c.l.b16 %v988
    %v1021 = vunpack.c.l.b16 %v989
    %v1022 = vunpack.c.l.b16 %v990
    %v1023 = vunpack.c.l.b16 %v991
    %v1024 = vunpack.c.l.b16 %v992
    %v1025 = vunpack.c.l.b16 %v993
    %v1026 = vunpack.c.l.b16 %v994
    %v1027 = vunpack.c.l.b16 %v995
    %v1028 = vpack.c.b16 %v1013, %v1012
    %v1029 = vpack.c.b16 %v1015, %v1014
    %v1030 = vpack.c.b16 %v1017, %v1016
    %v1031 = vpack.c.b16 %v1019, %v1018
    %v1032 = vpack.c.b16 %v1021, %v1020
    %v1033 = vpack.c.b16 %v1023, %v1022
    %v1034 = vpack.c.b16 %v1025, %v1024
    %v1035 = vpack.c.b16 %v1027, %v1026
    %1044 = vmatprep.subr.bf16.mxu0 0
    %1045 = vmatpush1.bf16.msra.mxu0 %v971
    %1046 = vmatprep.subr.bf16.mxu0 0
    %1047 = vmatpush1.bf16.msra.mxu0 %v972
    %1048 = vmatprep.subr.bf16.mxu0 0
    %1049 = vmatpush1.bf16.msra.mxu0 %v973
    %1050 = vmatprep.subr.bf16.mxu0 0
    %1051 = vmatpush1.bf16.msra.mxu0 %v974
    %1052 = vmatprep.subr.bf16.mxu0 0
    %1053 = vmatpush1.bf16.msra.mxu0 %v975
    %1054 = vmatprep.subr.bf16.mxu0 0
    %1055 = vmatpush1.bf16.msra.mxu0 %v976
    %1056 = vmatprep.subr.bf16.mxu0 0
    %1057 = vmatpush1.bf16.msra.mxu0 %v977
    %1058 = vmatprep.subr.bf16.mxu0 0
    %1059 = vmatpush1.bf16.msra.mxu0 %v978
    %1060 = vmatprep.subr.bf16.mxu0 0
    %1061 = vmatpush1.bf16.msra.mxu0 0
    %1062 = vmatprep.subr.bf16.mxu0 0
    %1063 = vmatpush1.bf16.msra.mxu0 0
    %1064 = vmatprep.subr.bf16.mxu0 0
    %1065 = vmatpush1.bf16.msra.mxu0 0
    %1066 = vmatprep.subr.bf16.mxu0 0
    %1067 = vmatpush1.bf16.msra.mxu0 0
    %1068 = vmatprep.subr.bf16.mxu0 0
    %1069 = vmatpush1.bf16.msra.mxu0 0
    %1070 = vmatprep.subr.bf16.mxu0 0
    %1071 = vmatpush1.bf16.msra.mxu0 0
    %1072 = vmatprep.subr.bf16.mxu0 0
    %1073 = vmatpush1.bf16.msra.mxu0 0
    %1074 = vmatprep.subr.bf16.mxu0 0
    %1075 = vmatpush1.bf16.msra.mxu0 0
    %1076 = vmatprep.mubr.bf16.mxu0 0
    %1077 = vmatmul.mubr.bf16.gmra.mrb[0].mxu0 %v1028
    %v1078 = vpop.f32.mrb[0].mxu0
    %v1079 = vadd.f32 0.0, %v1078
    %v1080 = vpop.f32.mrb[0].mxu0
    %v1081 = vpop.f32.mrb[0].mxu0
    %v1082 = vadd.f32 0.0, %v1081
    %v1083 = vpop.f32.mrb[0].mxu0
    %1084 = vmatprep.mubr.bf16.mxu0 0
    %1085 = vmatmul.mubr.bf16.gmra.mrb[0].mxu0 %v1029
    %v1086 = vpop.f32.mrb[0].mxu0
    %v1087 = vadd.f32 0.0, %v1086
    %v1088 = vpop.f32.mrb[0].mxu0
    %v1089 = vpop.f32.mrb[0].mxu0
    %v1090 = vadd.f32 0.0, %v1089
    %v1091 = vpop.f32.mrb[0].mxu0
    %1092 = vmatprep.mubr.bf16.mxu0 0
    %1093 = vmatmul.mubr.bf16.gmra.mrb[0].mxu0 %v1030
    %v1094 = vpop.f32.mrb[0].mxu0
    %v1095 = vadd.f32 0.0, %v1094
    %v1096 = vpop.f32.mrb[0].mxu0
    %v1097 = vpop.f32.mrb[0].mxu0
    %v1098 = vadd.f32 0.0, %v1097
    %v1099 = vpop.f32.mrb[0].mxu0
    %1100 = vmatprep.mubr.bf16.mxu0 0
    %1101 = vmatmul.mubr.bf16.gmra.mrb[0].mxu0 %v1031
    %v1102 = vpop.f32.mrb[0].mxu0
    %v1103 = vadd.f32 0.0, %v1102
    %v1104 = vpop.f32.mrb[0].mxu0
    %v1105 = vpop.f32.mrb[0].mxu0
    %v1106 = vadd.f32 0.0, %v1105
    %v1107 = vpop.f32.mrb[0].mxu0
    %1108 = vmatprep.mubr.bf16.mxu0 0
    %1109 = vmatmul.mubr.bf16.gmra.mrb[0].mxu0 %v1032
    %v1110 = vpop.f32.mrb[0].mxu0
    %v1111 = vadd.f32 0.0, %v1110
    %v1112 = vpop.f32.mrb[0].mxu0
    %v1113 = vpop.f32.mrb[0].mxu0
    %v1114 = vadd.f32 0.0, %v1113
    %v1115 = vpop.f32.mrb[0].mxu0
    %1116 = vmatprep.mubr.bf16.mxu0 0
    %1117 = vmatmul.mubr.bf16.gmra.mrb[0].mxu0 %v1033
    %v1118 = vpop.f32.mrb[0].mxu0
    %v1119 = vadd.f32 0.0, %v1118
    %v1120 = vpop.f32.mrb[0].mxu0
    %v1121 = vpop.f32.mrb[0].mxu0
    %v1122 = vadd.f32 0.0, %v1121
    %v1123 = vpop.f32.mrb[0].mxu0
    %1124 = vmatprep.mubr.bf16.mxu0 0
    %1125 = vmatmul.mubr.bf16.gmra.mrb[0].mxu0 %v1034
    %v1126 = vpop.f32.mrb[0].mxu0
    %v1127 = vadd.f32 0.0, %v1126
    %v1128 = vpop.f32.mrb[0].mxu0
    %v1129 = vpop.f32.mrb[0].mxu0
    %v1130 = vadd.f32 0.0, %v1129
    %v1131 = vpop.f32.mrb[0].mxu0
    %1132 = vmatprep.mubr.bf16.mxu0 0
    %1133 = vmatmul.mubr.bf16.gmra.mrb[0].mxu0 %v1035
    %v1134 = vpop.f32.mrb[0].mxu0
    %v1135 = vadd.f32 0.0, %v1134
    %v1136 = vpop.f32.mrb[0].mxu0
    %v1137 = vpop.f32.mrb[0].mxu0
    %v1138 = vadd.f32 0.0, %v1137
    %v1139 = vpop.f32.mrb[0].mxu0
    %1140 = vdwg.mxu0
    %v1141 = vadd.f32 %v747, %v1079
    %v1142 = vadd.f32 %v750, %v1082
    %v1143 = vadd.f32 %v755, %v1087
    %v1144 = vadd.f32 %v758, %v1090
    %v1145 = vadd.f32 %v763, %v1095
    %v1146 = vadd.f32 %v766, %v1098
    %v1147 = vadd.f32 %v771, %v1103
    %v1148 = vadd.f32 %v774, %v1106
    %v1149 = vadd.f32 %v779, %v1111
    %v1150 = vadd.f32 %v782, %v1114
    %v1151 = vadd.f32 %v787, %v1119
    %v1152 = vadd.f32 %v790, %v1122
    %v1153 = vadd.f32 %v795, %v1127
    %v1154 = vadd.f32 %v798, %v1130
    %v1155 = vadd.f32 %v803, %v1135
    %v1156 = vadd.f32 %v806, %v1138
    %v1157 = vld [vmem:[%s3] sm:$0x1]
    %v1159 = vlaneseq
    %v1160 = vshrl.u32 %v1159, 7
    %v1161 = vsub.s32 0, %v1160
    %v1162 = vrot.slane %v1157, %v1161
    %v1164 = vadd.f32 %v1141, %v1162
    %v1165 = vadd.f32 %v1142, %v1162
    %v1166 = vadd.f32 %v1143, %v1162
    %v1167 = vadd.f32 %v1144, %v1162
    %v1168 = vadd.f32 %v1145, %v1162
    %v1169 = vadd.f32 %v1146, %v1162
    %v1170 = vadd.f32 %v1147, %v1162
    %v1171 = vadd.f32 %v1148, %v1162
    %v1172 = vadd.f32 %v1149, %v1162
    %v1173 = vadd.f32 %v1150, %v1162
    %v1174 = vadd.f32 %v1151, %v1162
    %v1175 = vadd.f32 %v1152, %v1162
    %v1176 = vadd.f32 %v1153, %v1162
    %v1177 = vadd.f32 %v1154, %v1162
    %v1178 = vadd.f32 %v1155, %v1162
    %v1179 = vadd.f32 %v1156, %v1162
    %v1180 = vmax.f32 %v1164, 0.0
    %v1181 = vmax.f32 %v1165, 0.0
    %v1182 = vmax.f32 %v1166, 0.0
    %v1183 = vmax.f32 %v1167, 0.0
    %v1184 = vmax.f32 %v1168, 0.0
    %v1185 = vmax.f32 %v1169, 0.0
    %v1186 = vmax.f32 %v1170, 0.0
    %v1187 = vmax.f32 %v1171, 0.0
    %v1188 = vmax.f32 %v1172, 0.0
    %v1189 = vmax.f32 %v1173, 0.0
    %v1190 = vmax.f32 %v1174, 0.0
    %v1191 = vmax.f32 %v1175, 0.0
    %v1192 = vmax.f32 %v1176, 0.0
    %v1193 = vmax.f32 %v1177, 0.0
    %v1194 = vmax.f32 %v1178, 0.0
    %v1195 = vmax.f32 %v1179, 0.0
    %v1196 = vpack.c.bf16 %v1181, %v1180
    %v1197 = vpack.c.bf16 %v1183, %v1182
    %v1198 = vpack.c.bf16 %v1185, %v1184
    %v1199 = vpack.c.bf16 %v1187, %v1186
    %v1200 = vpack.c.bf16 %v1189, %v1188
    %v1201 = vpack.c.bf16 %v1191, %v1190
    %v1202 = vpack.c.bf16 %v1193, %v1192
    %v1203 = vpack.c.bf16 %v1195, %v1194
    %v1204 = vld [vmem:[#allocation8] sm:$0xf]
    %v1205 = vld [vmem:[#allocation8 + $0x4] sm:$0xf]
    %v1206 = vld [vmem:[#allocation8 + $0x8] sm:$0xf]
    %v1207 = vld [vmem:[#allocation8 + $0xc] sm:$0xf]
    %v1208 = vld [vmem:[#allocation8 + $0x10] sm:$0xf]
    %v1209 = vld [vmem:[#allocation8 + $0x14] sm:$0xf]
    %v1210 = vld [vmem:[#allocation8 + $0x18] sm:$0xf]
    %v1211 = vld [vmem:[#allocation8 + $0x1c] sm:$0xf]
    %v1212 = vld [vmem:[#allocation8 + $0x20] sm:$0xf]
    %v1213 = vld [vmem:[#allocation8 + $0x24] sm:$0xf]
    %v1214 = vld [vmem:[#allocation8 + $0x28] sm:$0xf]
    %v1215 = vld [vmem:[#allocation8 + $0x2c] sm:$0xf]
    %v1216 = vld [vmem:[#allocation8 + $0x30] sm:$0xf]
    %v1217 = vld [vmem:[#allocation8 + $0x34] sm:$0xf]
    %v1218 = vld [vmem:[#allocation8 + $0x38] sm:$0xf]
    %v1219 = vld [vmem:[#allocation8 + $0x3c] sm:$0xf]
    %v1236 = vunpack.c.l.b16 %v1204
    %v1237 = vunpack.c.l.b16 %v1205
    %v1238 = vunpack.c.l.b16 %v1206
    %v1239 = vunpack.c.l.b16 %v1207
    %v1240 = vunpack.c.l.b16 %v1208
    %v1241 = vunpack.c.l.b16 %v1209
    %v1242 = vunpack.c.l.b16 %v1210
    %v1243 = vunpack.c.l.b16 %v1211
    %v1244 = vunpack.c.l.b16 %v1212
    %v1245 = vunpack.c.l.b16 %v1213
    %v1246 = vunpack.c.l.b16 %v1214
    %v1247 = vunpack.c.l.b16 %v1215
    %v1248 = vunpack.c.l.b16 %v1216
    %v1249 = vunpack.c.l.b16 %v1217
    %v1250 = vunpack.c.l.b16 %v1218
    %v1251 = vunpack.c.l.b16 %v1219
    %v1252 = vpack.c.b16 %v1237, %v1236
    %v1253 = vpack.c.b16 %v1239, %v1238
    %v1254 = vpack.c.b16 %v1241, %v1240
    %v1255 = vpack.c.b16 %v1243, %v1242
    %v1256 = vpack.c.b16 %v1245, %v1244
    %v1257 = vpack.c.b16 %v1247, %v1246
    %v1258 = vpack.c.b16 %v1249, %v1248
    %v1259 = vpack.c.b16 %v1251, %v1250
    %1268 = vmatprep.subr.bf16.mxu0 0
    %1269 = vmatpush1.bf16.msra.mxu0 %v1252
    %1270 = vmatprep.subr.bf16.mxu0 0
    %1271 = vmatpush1.bf16.msra.mxu0 %v1253
    %1272 = vmatprep.subr.bf16.mxu0 0
    %1273 = vmatpush1.bf16.msra.mxu0 %v1254
    %1274 = vmatprep.subr.bf16.mxu0 0
    %1275 = vmatpush1.bf16.msra.mxu0 %v1255
    %1276 = vmatprep.subr.bf16.mxu0 0
    %1277 = vmatpush1.bf16.msra.mxu0 %v1256
    %1278 = vmatprep.subr.bf16.mxu0 0
    %1279 = vmatpush1.bf16.msra.mxu0 %v1257
    %1280 = vmatprep.subr.bf16.mxu0 0
    %1281 = vmatpush1.bf16.msra.mxu0 %v1258
    %1282 = vmatprep.subr.bf16.mxu0 0
    %1283 = vmatpush1.bf16.msra.mxu0 %v1259
    %1284 = vmatprep.subr.bf16.mxu0 0
    %1285 = vmatpush1.bf16.msra.mxu0 0
    %1286 = vmatprep.subr.bf16.mxu0 0
    %1287 = vmatpush1.bf16.msra.mxu0 0
    %1288 = vmatprep.subr.bf16.mxu0 0
    %1289 = vmatpush1.bf16.msra.mxu0 0
    %1290 = vmatprep.subr.bf16.mxu0 0
    %1291 = vmatpush1.bf16.msra.mxu0 0
    %1292 = vmatprep.subr.bf16.mxu0 0
    %1293 = vmatpush1.bf16.msra.mxu0 0
    %1294 = vmatprep.subr.bf16.mxu0 0
    %1295 = vmatpush1.bf16.msra.mxu0 0
    %1296 = vmatprep.subr.bf16.mxu0 0
    %1297 = vmatpush1.bf16.msra.mxu0 0
    %1298 = vmatprep.subr.bf16.mxu0 0
    %1299 = vmatpush1.bf16.msra.mxu0 0
    %1300 = vmatprep.mubr.bf16.mxu0 0
    %1301 = vmatmul.mubr.bf16.gmra.mrb[0].mxu0 %v1196
    %v1302 = vpop.f32.mrb[0].mxu0
    %v1303 = vadd.f32 0.0, %v1302
    %v1304 = vpop.f32.mrb[0].mxu0
    %v1305 = vpop.f32.mrb[0].mxu0
    %v1306 = vadd.f32 0.0, %v1305
    %v1307 = vpop.f32.mrb[0].mxu0
    %1308 = vmatprep.mubr.bf16.mxu0 0
    %1309 = vmatmul.mubr.bf16.gmra.mrb[0].mxu0 %v1197
    %v1310 = vpop.f32.mrb[0].mxu0
    %v1311 = vadd.f32 0.0, %v1310
    %v1312 = vpop.f32.mrb[0].mxu0
    %v1313 = vpop.f32.mrb[0].mxu0
    %v1314 = vadd.f32 0.0, %v1313
    %v1315 = vpop.f32.mrb[0].mxu0
    %1316 = vmatprep.mubr.bf16.mxu0 0
    %1317 = vmatmul.mubr.bf16.gmra.mrb[0].mxu0 %v1198
    %v1318 = vpop.f32.mrb[0].mxu0
    %v1319 = vadd.f32 0.0, %v1318
    %v1320 = vpop.f32.mrb[0].mxu0
    %v1321 = vpop.f32.mrb[0].mxu0
    %v1322 = vadd.f32 0.0, %v1321
    %v1323 = vpop.f32.mrb[0].mxu0
    %1324 = vmatprep.mubr.bf16.mxu0 0
    %1325 = vmatmul.mubr.bf16.gmra.mrb[0].mxu0 %v1199
    %v1326 = vpop.f32.mrb[0].mxu0
    %v1327 = vadd.f32 0.0, %v1326
    %v1328 = vpop.f32.mrb[0].mxu0
    %v1329 = vpop.f32.mrb[0].mxu0
    %v1330 = vadd.f32 0.0, %v1329
    %v1331 = vpop.f32.mrb[0].mxu0
    %1332 = vmatprep.mubr.bf16.mxu0 0
    %1333 = vmatmul.mubr.bf16.gmra.mrb[0].mxu0 %v1200
    %v1334 = vpop.f32.mrb[0].mxu0
    %v1335 = vadd.f32 0.0, %v1334
    %v1336 = vpop.f32.mrb[0].mxu0
    %v1337 = vpop.f32.mrb[0].mxu0
    %v1338 = vadd.f32 0.0, %v1337
    %v1339 = vpop.f32.mrb[0].mxu0
    %1340 = vmatprep.mubr.bf16.mxu0 0
    %1341 = vmatmul.mubr.bf16.gmra.mrb[0].mxu0 %v1201
    %v1342 = vpop.f32.mrb[0].mxu0
    %v1343 = vadd.f32 0.0, %v1342
    %v1344 = vpop.f32.mrb[0].mxu0
    %v1345 = vpop.f32.mrb[0].mxu0
    %v1346 = vadd.f32 0.0, %v1345
    %v1347 = vpop.f32.mrb[0].mxu0
    %1348 = vmatprep.mubr.bf16.mxu0 0
    %1349 = vmatmul.mubr.bf16.gmra.mrb[0].mxu0 %v1202
    %v1350 = vpop.f32.mrb[0].mxu0
    %v1351 = vadd.f32 0.0, %v1350
    %v1352 = vpop.f32.mrb[0].mxu0
    %v1353 = vpop.f32.mrb[0].mxu0
    %v1354 = vadd.f32 0.0, %v1353
    %v1355 = vpop.f32.mrb[0].mxu0
    %1356 = vmatprep.mubr.bf16.mxu0 0
    %1357 = vmatmul.mubr.bf16.gmra.mrb[0].mxu0 %v1203
    %v1358 = vpop.f32.mrb[0].mxu0
    %v1359 = vadd.f32 0.0, %v1358
    %v1360 = vpop.f32.mrb[0].mxu0
    %v1361 = vpop.f32.mrb[0].mxu0
    %v1362 = vadd.f32 0.0, %v1361
    %v1363 = vpop.f32.mrb[0].mxu0
    %1364 = vdwg.mxu0
    %v1365 = vpack.c.bf16 %v1306, %v1303
    %v1366 = vpack.c.bf16 %v1314, %v1311
    %v1367 = vpack.c.bf16 %v1322, %v1319
    %v1368 = vpack.c.bf16 %v1330, %v1327
    %v1369 = vpack.c.bf16 %v1338, %v1335
    %v1370 = vpack.c.bf16 %v1346, %v1343
    %v1371 = vpack.c.bf16 %v1354, %v1351
    %v1372 = vpack.c.bf16 %v1362, %v1359
    %s1373 = scalar_lea.vmem [#allocation8], 64
    %v1374 = vld [vmem:[%s1373] sm:$0xf]
    %v1375 = vld [vmem:[%s1373 + $0x4] sm:$0xf]
    %v1376 = vld [vmem:[%s1373 + $0x8] sm:$0xf]
    %v1377 = vld [vmem:[%s1373 + $0xc] sm:$0xf]
    %v1378 = vld [vmem:[%s1373 + $0x10] sm:$0xf]
    %v1379 = vld [vmem:[%s1373 + $0x14] sm:$0xf]
    %v1380 = vld [vmem:[%s1373 + $0x18] sm:$0xf]
    %v1381 = vld [vmem:[%s1373 + $0x1c] sm:$0xf]
    %v1382 = vld [vmem:[%s1373 + $0x20] sm:$0xf]
    %v1383 = vld [vmem:[%s1373 + $0x24] sm:$0xf]
    %v1384 = vld [vmem:[%s1373 + $0x28] sm:$0xf]
    %v1385 = vld [vmem:[%s1373 + $0x2c] sm:$0xf]
    %v1386 = vld [vmem:[%s1373 + $0x30] sm:$0xf]
    %v1387 = vld [vmem:[%s1373 + $0x34] sm:$0xf]
    %v1388 = vld [vmem:[%s1373 + $0x38] sm:$0xf]
    %v1389 = vld [vmem:[%s1373 + $0x3c] sm:$0xf]
    %v1406 = vunpack.c.l.b16 %v1374
    %v1407 = vunpack.c.l.b16 %v1375
    %v1408 = vunpack.c.l.b16 %v1376
    %v1409 = vunpack.c.l.b16 %v1377
    %v1410 = vunpack.c.l.b16 %v1378
    %v1411 = vunpack.c.l.b16 %v1379
    %v1412 = vunpack.c.l.b16 %v1380
    %v1413 = vunpack.c.l.b16 %v1381
    %v1414 = vunpack.c.l.b16 %v1382
    %v1415 = vunpack.c.l.b16 %v1383
    %v1416 = vunpack.c.l.b16 %v1384
    %v1417 = vunpack.c.l.b16 %v1385
    %v1418 = vunpack.c.l.b16 %v1386
    %v1419 = vunpack.c.l.b16 %v1387
    %v1420 = vunpack.c.l.b16 %v1388
    %v1421 = vunpack.c.l.b16 %v1389
    %v1422 = vpack.c.b16 %v1407, %v1406
    %v1423 = vpack.c.b16 %v1409, %v1408
    %v1424 = vpack.c.b16 %v1411, %v1410
    %v1425 = vpack.c.b16 %v1413, %v1412
    %v1426 = vpack.c.b16 %v1415, %v1414
    %v1427 = vpack.c.b16 %v1417, %v1416
    %v1428 = vpack.c.b16 %v1419, %v1418
    %v1429 = vpack.c.b16 %v1421, %v1420
    %1438 = vmatprep.subr.bf16.mxu0 0
    %1439 = vmatpush1.bf16.msra.mxu0 %v1422
    %1440 = vmatprep.subr.bf16.mxu0 0
    %1441 = vmatpush1.bf16.msra.mxu0 %v1423
    %1442 = vmatprep.subr.bf16.mxu0 0
    %1443 = vmatpush1.bf16.msra.mxu0 %v1424
    %1444 = vmatprep.subr.bf16.mxu0 0
    %1445 = vmatpush1.bf16.msra.mxu0 %v1425
    %1446 = vmatprep.subr.bf16.mxu0 0
    %1447 = vmatpush1.bf16.msra.mxu0 %v1426
    %1448 = vmatprep.subr.bf16.mxu0 0
    %1449 = vmatpush1.bf16.msra.mxu0 %v1427
    %1450 = vmatprep.subr.bf16.mxu0 0
    %1451 = vmatpush1.bf16.msra.mxu0 %v1428
    %1452 = vmatprep.subr.bf16.mxu0 0
    %1453 = vmatpush1.bf16.msra.mxu0 %v1429
    %1454 = vmatprep.subr.bf16.mxu0 0
    %1455 = vmatpush1.bf16.msra.mxu0 0
    %1456 = vmatprep.subr.bf16.mxu0 0
    %1457 = vmatpush1.bf16.msra.mxu0 0
    %1458 = vmatprep.subr.bf16.mxu0 0
    %1459 = vmatpush1.bf16.msra.mxu0 0
    %1460 = vmatprep.subr.bf16.mxu0 0
    %1461 = vmatpush1.bf16.msra.mxu0 0
    %1462 = vmatprep.subr.bf16.mxu0 0
    %1463 = vmatpush1.bf16.msra.mxu0 0
    %1464 = vmatprep.subr.bf16.mxu0 0
    %1465 = vmatpush1.bf16.msra.mxu0 0
    %1466 = vmatprep.subr.bf16.mxu0 0
    %1467 = vmatpush1.bf16.msra.mxu0 0
    %1468 = vmatprep.subr.bf16.mxu0 0
    %1469 = vmatpush1.bf16.msra.mxu0 0
    %1470 = vmatprep.mubr.bf16.mxu0 0
    %1471 = vmatmul.mubr.bf16.gmra.mrb[0].mxu0 %v1196
    %v1472 = vpop.f32.mrb[0].mxu0
    %v1473 = vadd.f32 0.0, %v1472
    %v1474 = vpop.f32.mrb[0].mxu0
    %v1475 = vpop.f32.mrb[0].mxu0
    %v1476 = vadd.f32 0.0, %v1475
    %v1477 = vpop.f32.mrb[0].mxu0
    %1478 = vmatprep.mubr.bf16.mxu0 0
    %1479 = vmatmul.mubr.bf16.gmra.mrb[0].mxu0 %v1197
    %v1480 = vpop.f32.mrb[0].mxu0
    %v1481 = vadd.f32 0.0, %v1480
    %v1482 = vpop.f32.mrb[0].mxu0
    %v1483 = vpop.f32.mrb[0].mxu0
    %v1484 = vadd.f32 0.0, %v1483
    %v1485 = vpop.f32.mrb[0].mxu0
    %1486 = vmatprep.mubr.bf16.mxu0 0
    %1487 = vmatmul.mubr.bf16.gmra.mrb[0].mxu0 %v1198
    %v1488 = vpop.f32.mrb[0].mxu0
    %v1489 = vadd.f32 0.0, %v1488
    %v1490 = vpop.f32.mrb[0].mxu0
    %v1491 = vpop.f32.mrb[0].mxu0
    %v1492 = vadd.f32 0.0, %v1491
    %v1493 = vpop.f32.mrb[0].mxu0
    %1494 = vmatprep.mubr.bf16.mxu0 0
    %1495 = vmatmul.mubr.bf16.gmra.mrb[0].mxu0 %v1199
    %v1496 = vpop.f32.mrb[0].mxu0
    %v1497 = vadd.f32 0.0, %v1496
    %v1498 = vpop.f32.mrb[0].mxu0
    %v1499 = vpop.f32.mrb[0].mxu0
    %v1500 = vadd.f32 0.0, %v1499
    %v1501 = vpop.f32.mrb[0].mxu0
    %1502 = vmatprep.mubr.bf16.mxu0 0
    %1503 = vmatmul.mubr.bf16.gmra.mrb[0].mxu0 %v1200
    %v1504 = vpop.f32.mrb[0].mxu0
    %v1505 = vadd.f32 0.0, %v1504
    %v1506 = vpop.f32.mrb[0].mxu0
    %v1507 = vpop.f32.mrb[0].mxu0
    %v1508 = vadd.f32 0.0, %v1507
    %v1509 = vpop.f32.mrb[0].mxu0
    %1510 = vmatprep.mubr.bf16.mxu0 0
    %1511 = vmatmul.mubr.bf16.gmra.mrb[0].mxu0 %v1201
    %v1512 = vpop.f32.mrb[0].mxu0
    %v1513 = vadd.f32 0.0, %v1512
    %v1514 = vpop.f32.mrb[0].mxu0
    %v1515 = vpop.f32.mrb[0].mxu0
    %v1516 = vadd.f32 0.0, %v1515
    %v1517 = vpop.f32.mrb[0].mxu0
    %1518 = vmatprep.mubr.bf16.mxu0 0
    %1519 = vmatmul.mubr.bf16.gmra.mrb[0].mxu0 %v1202
    %v1520 = vpop.f32.mrb[0].mxu0
    %v1521 = vadd.f32 0.0, %v1520
    %v1522 = vpop.f32.mrb[0].mxu0
    %v1523 = vpop.f32.mrb[0].mxu0
    %v1524 = vadd.f32 0.0, %v1523
    %v1525 = vpop.f32.mrb[0].mxu0
    %1526 = vmatprep.mubr.bf16.mxu0 0
    %1527 = vmatmul.mubr.bf16.gmra.mrb[0].mxu0 %v1203
    %v1528 = vpop.f32.mrb[0].mxu0
    %v1529 = vadd.f32 0.0, %v1528
    %v1530 = vpop.f32.mrb[0].mxu0
    %v1531 = vpop.f32.mrb[0].mxu0
    %v1532 = vadd.f32 0.0, %v1531
    %v1533 = vpop.f32.mrb[0].mxu0
    %1534 = vdwg.mxu0
    %v1535 = vpack.c.bf16 %v1476, %v1473
    %v1536 = vpack.c.bf16 %v1484, %v1481
    %v1537 = vpack.c.bf16 %v1492, %v1489
    %v1538 = vpack.c.bf16 %v1500, %v1497
    %v1539 = vpack.c.bf16 %v1508, %v1505
    %v1540 = vpack.c.bf16 %v1516, %v1513
    %v1541 = vpack.c.bf16 %v1524, %v1521
    %v1542 = vpack.c.bf16 %v1532, %v1529
    %1543 = vmatprep.subr.bf16.mxu0 0
    %1544 = vmatpush1.bf16.msra.mxu0 %v1535
    %1545 = vmatprep.subr.bf16.mxu0 0
    %1546 = vmatpush1.bf16.msra.mxu0 %v1536
    %1547 = vmatprep.subr.bf16.mxu0 0
    %1548 = vmatpush1.bf16.msra.mxu0 %v1537
    %1549 = vmatprep.subr.bf16.mxu0 0
    %1550 = vmatpush1.bf16.msra.mxu0 %v1538
    %1551 = vmatprep.subr.bf16.mxu0 0
    %1552 = vmatpush1.bf16.msra.mxu0 %v1539
    %1553 = vmatprep.subr.bf16.mxu0 0
    %1554 = vmatpush1.bf16.msra.mxu0 %v1540
    %1555 = vmatprep.subr.bf16.mxu0 0
    %1556 = vmatpush1.bf16.msra.mxu0 %v1541
    %1557 = vmatprep.subr.bf16.mxu0 0
    %1558 = vmatpush1.bf16.msra.mxu0 %v1542
    %1559 = vmatprep.subr.bf16.mxu0 0
    %1560 = vmatpush1.bf16.msra.mxu0 0
    %1561 = vmatprep.subr.bf16.mxu0 0
    %1562 = vmatpush1.bf16.msra.mxu0 0
    %1563 = vmatprep.subr.bf16.mxu0 0
    %1564 = vmatpush1.bf16.msra.mxu0 0
    %1565 = vmatprep.subr.bf16.mxu0 0
    %1566 = vmatpush1.bf16.msra.mxu0 0
    %1567 = vmatprep.subr.bf16.mxu0 0
    %1568 = vmatpush1.bf16.msra.mxu0 0
    %1569 = vmatprep.subr.bf16.mxu0 0
    %1570 = vmatpush1.bf16.msra.mxu0 0
    %1571 = vmatprep.subr.bf16.mxu0 0
    %1572 = vmatpush1.bf16.msra.mxu0 0
    %1573 = vmatprep.subr.bf16.mxu0 0
    %1574 = vmatpush1.bf16.msra.mxu0 0
    %1575 = vmatprep.mubr.bf16.mxu0 0
    %1576 = vmatmul.mubr.bf16.gmra.mrb[0].mxu0 %v551
    %v1577 = vpop.f32.mrb[0].mxu0
    %v1578 = vadd.f32 0.0, %v1577
    %v1579 = vpop.f32.mrb[0].mxu0
    %v1580 = vpop.f32.mrb[0].mxu0
    %v1581 = vadd.f32 0.0, %v1580
    %v1582 = vpop.f32.mrb[0].mxu0
    %1583 = vmatprep.mubr.bf16.mxu0 0
    %1584 = vmatmul.mubr.bf16.gmra.mrb[0].mxu0 %v552
    %v1585 = vpop.f32.mrb[0].mxu0
    %v1586 = vadd.f32 0.0, %v1585
    %v1587 = vpop.f32.mrb[0].mxu0
    %v1588 = vpop.f32.mrb[0].mxu0
    %v1589 = vadd.f32 0.0, %v1588
    %v1590 = vpop.f32.mrb[0].mxu0
    %1591 = vmatprep.mubr.bf16.mxu0 0
    %1592 = vmatmul.mubr.bf16.gmra.mrb[0].mxu0 %v553
    %v1593 = vpop.f32.mrb[0].mxu0
    %v1594 = vadd.f32 0.0, %v1593
    %v1595 = vpop.f32.mrb[0].mxu0
    %v1596 = vpop.f32.mrb[0].mxu0
    %v1597 = vadd.f32 0.0, %v1596
    %v1598 = vpop.f32.mrb[0].mxu0
    %1599 = vmatprep.mubr.bf16.mxu0 0
    %1600 = vmatmul.mubr.bf16.gmra.mrb[0].mxu0 %v554
    %v1601 = vpop.f32.mrb[0].mxu0
    %v1602 = vadd.f32 0.0, %v1601
    %v1603 = vpop.f32.mrb[0].mxu0
    %v1604 = vpop.f32.mrb[0].mxu0
    %v1605 = vadd.f32 0.0, %v1604
    %v1606 = vpop.f32.mrb[0].mxu0
    %1607 = vmatprep.mubr.bf16.mxu0 0
    %1608 = vmatmul.mubr.bf16.gmra.mrb[0].mxu0 %v555
    %v1609 = vpop.f32.mrb[0].mxu0
    %v1610 = vadd.f32 0.0, %v1609
    %v1611 = vpop.f32.mrb[0].mxu0
    %v1612 = vpop.f32.mrb[0].mxu0
    %v1613 = vadd.f32 0.0, %v1612
    %v1614 = vpop.f32.mrb[0].mxu0
    %1615 = vmatprep.mubr.bf16.mxu0 0
    %1616 = vmatmul.mubr.bf16.gmra.mrb[0].mxu0 %v556
    %v1617 = vpop.f32.mrb[0].mxu0
    %v1618 = vadd.f32 0.0, %v1617
    %v1619 = vpop.f32.mrb[0].mxu0
    %v1620 = vpop.f32.mrb[0].mxu0
    %v1621 = vadd.f32 0.0, %v1620
    %v1622 = vpop.f32.mrb[0].mxu0
    %1623 = vmatprep.mubr.bf16.mxu0 0
    %1624 = vmatmul.mubr.bf16.gmra.mrb[0].mxu0 %v557
    %v1625 = vpop.f32.mrb[0].mxu0
    %v1626 = vadd.f32 0.0, %v1625
    %v1627 = vpop.f32.mrb[0].mxu0
    %v1628 = vpop.f32.mrb[0].mxu0
    %v1629 = vadd.f32 0.0, %v1628
    %v1630 = vpop.f32.mrb[0].mxu0
    %1631 = vmatprep.mubr.bf16.mxu0 0
    %1632 = vmatmul.mubr.bf16.gmra.mrb[0].mxu0 %v558
    %v1633 = vpop.f32.mrb[0].mxu0
    %v1634 = vadd.f32 0.0, %v1633
    %v1635 = vpop.f32.mrb[0].mxu0
    %v1636 = vpop.f32.mrb[0].mxu0
    %v1637 = vadd.f32 0.0, %v1636
    %v1638 = vpop.f32.mrb[0].mxu0
    %1639 = vdwg.mxu0
    %1640 = vmatprep.subr.bf16.mxu0 0
    %1641 = vmatpush1.bf16.msra.mxu0 %v1365
    %1642 = vmatprep.subr.bf16.mxu0 0
    %1643 = vmatpush1.bf16.msra.mxu0 %v1366
    %1644 = vmatprep.subr.bf16.mxu0 0
    %1645 = vmatpush1.bf16.msra.mxu0 %v1367
    %1646 = vmatprep.subr.bf16.mxu0 0
    %1647 = vmatpush1.bf16.msra.mxu0 %v1368
    %1648 = vmatprep.subr.bf16.mxu0 0
    %1649 = vmatpush1.bf16.msra.mxu0 %v1369
    %1650 = vmatprep.subr.bf16.mxu0 0
    %1651 = vmatpush1.bf16.msra.mxu0 %v1370
    %1652 = vmatprep.subr.bf16.mxu0 0
    %1653 = vmatpush1.bf16.msra.mxu0 %v1371
    %1654 = vmatprep.subr.bf16.mxu0 0
    %1655 = vmatpush1.bf16.msra.mxu0 %v1372
    %1656 = vmatprep.subr.bf16.mxu0 0
    %1657 = vmatpush1.bf16.msra.mxu0 0
    %1658 = vmatprep.subr.bf16.mxu0 0
    %1659 = vmatpush1.bf16.msra.mxu0 0
    %1660 = vmatprep.subr.bf16.mxu0 0
    %1661 = vmatpush1.bf16.msra.mxu0 0
    %1662 = vmatprep.subr.bf16.mxu0 0
    %1663 = vmatpush1.bf16.msra.mxu0 0
    %1664 = vmatprep.subr.bf16.mxu0 0
    %1665 = vmatpush1.bf16.msra.mxu0 0
    %1666 = vmatprep.subr.bf16.mxu0 0
    %1667 = vmatpush1.bf16.msra.mxu0 0
    %1668 = vmatprep.subr.bf16.mxu0 0
    %1669 = vmatpush1.bf16.msra.mxu0 0
    %1670 = vmatprep.subr.bf16.mxu0 0
    %1671 = vmatpush1.bf16.msra.mxu0 0
    %1672 = vmatprep.mubr.bf16.mxu0 0
    %1673 = vmatmul.mubr.bf16.gmra.mrb[0].mxu0 %v696
    %v1674 = vpop.f32.mrb[0].mxu0
    %v1675 = vadd.f32 %v1578, %v1674
    %v1676 = vpop.f32.mrb[0].mxu0
    %v1677 = vpop.f32.mrb[0].mxu0
    %v1678 = vadd.f32 %v1581, %v1677
    %v1679 = vpop.f32.mrb[0].mxu0
    %1680 = vmatprep.mubr.bf16.mxu0 0
    %1681 = vmatmul.mubr.bf16.gmra.mrb[0].mxu0 %v697
    %v1682 = vpop.f32.mrb[0].mxu0
    %v1683 = vadd.f32 %v1586, %v1682
    %v1684 = vpop.f32.mrb[0].mxu0
    %v1685 = vpop.f32.mrb[0].mxu0
    %v1686 = vadd.f32 %v1589, %v1685
    %v1687 = vpop.f32.mrb[0].mxu0
    %1688 = vmatprep.mubr.bf16.mxu0 0
    %1689 = vmatmul.mubr.bf16.gmra.mrb[0].mxu0 %v698
    %v1690 = vpop.f32.mrb[0].mxu0
    %v1691 = vadd.f32 %v1594, %v1690
    %v1692 = vpop.f32.mrb[0].mxu0
    %v1693 = vpop.f32.mrb[0].mxu0
    %v1694 = vadd.f32 %v1597, %v1693
    %v1695 = vpop.f32.mrb[0].mxu0
    %1696 = vmatprep.mubr.bf16.mxu0 0
    %1697 = vmatmul.mubr.bf16.gmra.mrb[0].mxu0 %v699
    %v1698 = vpop.f32.mrb[0].mxu0
    %v1699 = vadd.f32 %v1602, %v1698
    %v1700 = vpop.f32.mrb[0].mxu0
    %v1701 = vpop.f32.mrb[0].mxu0
    %v1702 = vadd.f32 %v1605, %v1701
    %v1703 = vpop.f32.mrb[0].mxu0
    %1704 = vmatprep.mubr.bf16.mxu0 0
    %1705 = vmatmul.mubr.bf16.gmra.mrb[0].mxu0 %v700
    %v1706 = vpop.f32.mrb[0].mxu0
    %v1707 = vadd.f32 %v1610, %v1706
    %v1708 = vpop.f32.mrb[0].mxu0
    %v1709 = vpop.f32.mrb[0].mxu0
    %v1710 = vadd.f32 %v1613, %v1709
    %v1711 = vpop.f32.mrb[0].mxu0
    %1712 = vmatprep.mubr.bf16.mxu0 0
    %1713 = vmatmul.mubr.bf16.gmra.mrb[0].mxu0 %v701
    %v1714 = vpop.f32.mrb[0].mxu0
    %v1715 = vadd.f32 %v1618, %v1714
    %v1716 = vpop.f32.mrb[0].mxu0
    %v1717 = vpop.f32.mrb[0].mxu0
    %v1718 = vadd.f32 %v1621, %v1717
    %v1719 = vpop.f32.mrb[0].mxu0
    %1720 = vmatprep.mubr.bf16.mxu0 0
    %1721 = vmatmul.mubr.bf16.gmra.mrb[0].mxu0 %v702
    %v1722 = vpop.f32.mrb[0].mxu0
    %v1723 = vadd.f32 %v1626, %v1722
    %v1724 = vpop.f32.mrb[0].mxu0
    %v1725 = vpop.f32.mrb[0].mxu0
    %v1726 = vadd.f32 %v1629, %v1725
    %v1727 = vpop.f32.mrb[0].mxu0
    %1728 = vmatprep.mubr.bf16.mxu0 0
    %1729 = vmatmul.mubr.bf16.gmra.mrb[0].mxu0 %v703
    %v1730 = vpop.f32.mrb[0].mxu0
    %v1731 = vadd.f32 %v1634, %v1730
    %v1732 = vpop.f32.mrb[0].mxu0
    %v1733 = vpop.f32.mrb[0].mxu0
    %v1734 = vadd.f32 %v1637, %v1733
    %v1735 = vpop.f32.mrb[0].mxu0
    %1736 = vdwg.mxu0
    %s1737 = scalar_lea.vmem [#allocation8], 128
    %v1738 = vld [vmem:[%s1737] sm:$0xf]
    %v1739 = vld [vmem:[%s1737 + $0x4] sm:$0xf]
    %v1740 = vld [vmem:[%s1737 + $0x8] sm:$0xf]
    %v1741 = vld [vmem:[%s1737 + $0xc] sm:$0xf]
    %v1742 = vld [vmem:[%s1737 + $0x10] sm:$0xf]
    %v1743 = vld [vmem:[%s1737 + $0x14] sm:$0xf]
    %v1744 = vld [vmem:[%s1737 + $0x18] sm:$0xf]
    %v1745 = vld [vmem:[%s1737 + $0x1c] sm:$0xf]
    %v1746 = vld [vmem:[%s1737 + $0x20] sm:$0xf]
    %v1747 = vld [vmem:[%s1737 + $0x24] sm:$0xf]
    %v1748 = vld [vmem:[%s1737 + $0x28] sm:$0xf]
    %v1749 = vld [vmem:[%s1737 + $0x2c] sm:$0xf]
    %v1750 = vld [vmem:[%s1737 + $0x30] sm:$0xf]
    %v1751 = vld [vmem:[%s1737 + $0x34] sm:$0xf]
    %v1752 = vld [vmem:[%s1737 + $0x38] sm:$0xf]
    %v1753 = vld [vmem:[%s1737 + $0x3c] sm:$0xf]
    %v1770 = vunpack.c.l.b16 %v1738
    %v1771 = vunpack.c.l.b16 %v1739
    %v1772 = vunpack.c.l.b16 %v1740
    %v1773 = vunpack.c.l.b16 %v1741
    %v1774 = vunpack.c.l.b16 %v1742
    %v1775 = vunpack.c.l.b16 %v1743
    %v1776 = vunpack.c.l.b16 %v1744
    %v1777 = vunpack.c.l.b16 %v1745
    %v1778 = vunpack.c.l.b16 %v1746
    %v1779 = vunpack.c.l.b16 %v1747
    %v1780 = vunpack.c.l.b16 %v1748
    %v1781 = vunpack.c.l.b16 %v1749
    %v1782 = vunpack.c.l.b16 %v1750
    %v1783 = vunpack.c.l.b16 %v1751
    %v1784 = vunpack.c.l.b16 %v1752
    %v1785 = vunpack.c.l.b16 %v1753
    %v1786 = vpack.c.b16 %v1771, %v1770
    %v1787 = vpack.c.b16 %v1773, %v1772
    %v1788 = vpack.c.b16 %v1775, %v1774
    %v1789 = vpack.c.b16 %v1777, %v1776
    %v1790 = vpack.c.b16 %v1779, %v1778
    %v1791 = vpack.c.b16 %v1781, %v1780
    %v1792 = vpack.c.b16 %v1783, %v1782
    %v1793 = vpack.c.b16 %v1785, %v1784
    %1802 = vmatprep.subr.bf16.mxu0 0
    %1803 = vmatpush1.bf16.msra.mxu0 %v1786
    %1804 = vmatprep.subr.bf16.mxu0 0
    %1805 = vmatpush1.bf16.msra.mxu0 %v1787
    %1806 = vmatprep.subr.bf16.mxu0 0
    %1807 = vmatpush1.bf16.msra.mxu0 %v1788
    %1808 = vmatprep.subr.bf16.mxu0 0
    %1809 = vmatpush1.bf16.msra.mxu0 %v1789
    %1810 = vmatprep.subr.bf16.mxu0 0
    %1811 = vmatpush1.bf16.msra.mxu0 %v1790
    %1812 = vmatprep.subr.bf16.mxu0 0
    %1813 = vmatpush1.bf16.msra.mxu0 %v1791
    %1814 = vmatprep.subr.bf16.mxu0 0
    %1815 = vmatpush1.bf16.msra.mxu0 %v1792
    %1816 = vmatprep.subr.bf16.mxu0 0
    %1817 = vmatpush1.bf16.msra.mxu0 %v1793
    %1818 = vmatprep.subr.bf16.mxu0 0
    %1819 = vmatpush1.bf16.msra.mxu0 0
    %1820 = vmatprep.subr.bf16.mxu0 0
    %1821 = vmatpush1.bf16.msra.mxu0 0
    %1822 = vmatprep.subr.bf16.mxu0 0
    %1823 = vmatpush1.bf16.msra.mxu0 0
    %1824 = vmatprep.subr.bf16.mxu0 0
    %1825 = vmatpush1.bf16.msra.mxu0 0
    %1826 = vmatprep.subr.bf16.mxu0 0
    %1827 = vmatpush1.bf16.msra.mxu0 0
    %1828 = vmatprep.subr.bf16.mxu0 0
    %1829 = vmatpush1.bf16.msra.mxu0 0
    %1830 = vmatprep.subr.bf16.mxu0 0
    %1831 = vmatpush1.bf16.msra.mxu0 0
    %1832 = vmatprep.subr.bf16.mxu0 0
    %1833 = vmatpush1.bf16.msra.mxu0 0
    %1834 = vmatprep.mubr.bf16.mxu0 0
    %1835 = vmatmul.mubr.bf16.gmra.mrb[0].mxu0 %v1196
    %v1836 = vpop.f32.mrb[0].mxu0
    %v1837 = vadd.f32 0.0, %v1836
    %v1838 = vpop.f32.mrb[0].mxu0
    %v1839 = vpop.f32.mrb[0].mxu0
    %v1840 = vadd.f32 0.0, %v1839
    %v1841 = vpop.f32.mrb[0].mxu0
    %1842 = vmatprep.mubr.bf16.mxu0 0
    %1843 = vmatmul.mubr.bf16.gmra.mrb[0].mxu0 %v1197
    %v1844 = vpop.f32.mrb[0].mxu0
    %v1845 = vadd.f32 0.0, %v1844
    %v1846 = vpop.f32.mrb[0].mxu0
    %v1847 = vpop.f32.mrb[0].mxu0
    %v1848 = vadd.f32 0.0, %v1847
    %v1849 = vpop.f32.mrb[0].mxu0
    %1850 = vmatprep.mubr.bf16.mxu0 0
    %1851 = vmatmul.mubr.bf16.gmra.mrb[0].mxu0 %v1198
    %v1852 = vpop.f32.mrb[0].mxu0
    %v1853 = vadd.f32 0.0, %v1852
    %v1854 = vpop.f32.mrb[0].mxu0
    %v1855 = vpop.f32.mrb[0].mxu0
    %v1856 = vadd.f32 0.0, %v1855
    %v1857 = vpop.f32.mrb[0].mxu0
    %1858 = vmatprep.mubr.bf16.mxu0 0
    %1859 = vmatmul.mubr.bf16.gmra.mrb[0].mxu0 %v1199
    %v1860 = vpop.f32.mrb[0].mxu0
    %v1861 = vadd.f32 0.0, %v1860
    %v1862 = vpop.f32.mrb[0].mxu0
    %v1863 = vpop.f32.mrb[0].mxu0
    %v1864 = vadd.f32 0.0, %v1863
    %v1865 = vpop.f32.mrb[0].mxu0
    %1866 = vmatprep.mubr.bf16.mxu0 0
    %1867 = vmatmul.mubr.bf16.gmra.mrb[0].mxu0 %v1200
    %v1868 = vpop.f32.mrb[0].mxu0
    %v1869 = vadd.f32 0.0, %v1868
    %v1870 = vpop.f32.mrb[0].mxu0
    %v1871 = vpop.f32.mrb[0].mxu0
    %v1872 = vadd.f32 0.0, %v1871
    %v1873 = vpop.f32.mrb[0].mxu0
    %1874 = vmatprep.mubr.bf16.mxu0 0
    %1875 = vmatmul.mubr.bf16.gmra.mrb[0].mxu0 %v1201
    %v1876 = vpop.f32.mrb[0].mxu0
    %v1877 = vadd.f32 0.0, %v1876
    %v1878 = vpop.f32.mrb[0].mxu0
    %v1879 = vpop.f32.mrb[0].mxu0
    %v1880 = vadd.f32 0.0, %v1879
    %v1881 = vpop.f32.mrb[0].mxu0
    %1882 = vmatprep.mubr.bf16.mxu0 0
    %1883 = vmatmul.mubr.bf16.gmra.mrb[0].mxu0 %v1202
    %v1884 = vpop.f32.mrb[0].mxu0
    %v1885 = vadd.f32 0.0, %v1884
    %v1886 = vpop.f32.mrb[0].mxu0
    %v1887 = vpop.f32.mrb[0].mxu0
    %v1888 = vadd.f32 0.0, %v1887
    %v1889 = vpop.f32.mrb[0].mxu0
    %1890 = vmatprep.mubr.bf16.mxu0 0
    %1891 = vmatmul.mubr.bf16.gmra.mrb[0].mxu0 %v1203
    %v1892 = vpop.f32.mrb[0].mxu0
    %v1893 = vadd.f32 0.0, %v1892
    %v1894 = vpop.f32.mrb[0].mxu0
    %v1895 = vpop.f32.mrb[0].mxu0
    %v1896 = vadd.f32 0.0, %v1895
    %v1897 = vpop.f32.mrb[0].mxu0
    %1898 = vdwg.mxu0
    %v1899 = vpack.c.bf16 %v1840, %v1837
    %v1900 = vpack.c.bf16 %v1848, %v1845
    %v1901 = vpack.c.bf16 %v1856, %v1853
    %v1902 = vpack.c.bf16 %v1864, %v1861
    %v1903 = vpack.c.bf16 %v1872, %v1869
    %v1904 = vpack.c.bf16 %v1880, %v1877
    %v1905 = vpack.c.bf16 %v1888, %v1885
    %v1906 = vpack.c.bf16 %v1896, %v1893
    %1907 = vmatprep.subr.bf16.mxu0 0
    %1908 = vmatpush1.bf16.msra.mxu0 %v1899
    %1909 = vmatprep.subr.bf16.mxu0 0
    %1910 = vmatpush1.bf16.msra.mxu0 %v1900
    %1911 = vmatprep.subr.bf16.mxu0 0
    %1912 = vmatpush1.bf16.msra.mxu0 %v1901
    %1913 = vmatprep.subr.bf16.mxu0 0
    %1914 = vmatpush1.bf16.msra.mxu0 %v1902
    %1915 = vmatprep.subr.bf16.mxu0 0
    %1916 = vmatpush1.bf16.msra.mxu0 %v1903
    %1917 = vmatprep.subr.bf16.mxu0 0
    %1918 = vmatpush1.bf16.msra.mxu0 %v1904
    %1919 = vmatprep.subr.bf16.mxu0 0
    %1920 = vmatpush1.bf16.msra.mxu0 %v1905
    %1921 = vmatprep.subr.bf16.mxu0 0
    %1922 = vmatpush1.bf16.msra.mxu0 %v1906
    %1923 = vmatprep.subr.bf16.mxu0 0
    %1924 = vmatpush1.bf16.msra.mxu0 0
    %1925 = vmatprep.subr.bf16.mxu0 0
    %1926 = vmatpush1.bf16.msra.mxu0 0
    %1927 = vmatprep.subr.bf16.mxu0 0
    %1928 = vmatpush1.bf16.msra.mxu0 0
    %1929 = vmatprep.subr.bf16.mxu0 0
    %1930 = vmatpush1.bf16.msra.mxu0 0
    %1931 = vmatprep.subr.bf16.mxu0 0
    %1932 = vmatpush1.bf16.msra.mxu0 0
    %1933 = vmatprep.subr.bf16.mxu0 0
    %1934 = vmatpush1.bf16.msra.mxu0 0
    %1935 = vmatprep.subr.bf16.mxu0 0
    %1936 = vmatpush1.bf16.msra.mxu0 0
    %1937 = vmatprep.subr.bf16.mxu0 0
    %1938 = vmatpush1.bf16.msra.mxu0 0
    %1939 = vmatprep.mubr.bf16.mxu0 0
    %1940 = vmatmul.mubr.bf16.gmra.mrb[0].mxu0 %v1028
    %v1941 = vpop.f32.mrb[0].mxu0
    %v1942 = vadd.f32 0.0, %v1941
    %v1943 = vpop.f32.mrb[0].mxu0
    %v1944 = vpop.f32.mrb[0].mxu0
    %v1945 = vadd.f32 0.0, %v1944
    %v1946 = vpop.f32.mrb[0].mxu0
    %1947 = vmatprep.mubr.bf16.mxu0 0
    %1948 = vmatmul.mubr.bf16.gmra.mrb[0].mxu0 %v1029
    %v1949 = vpop.f32.mrb[0].mxu0
    %v1950 = vadd.f32 0.0, %v1949
    %v1951 = vpop.f32.mrb[0].mxu0
    %v1952 = vpop.f32.mrb[0].mxu0
    %v1953 = vadd.f32 0.0, %v1952
    %v1954 = vpop.f32.mrb[0].mxu0
    %1955 = vmatprep.mubr.bf16.mxu0 0
    %1956 = vmatmul.mubr.bf16.gmra.mrb[0].mxu0 %v1030
    %v1957 = vpop.f32.mrb[0].mxu0
    %v1958 = vadd.f32 0.0, %v1957
    %v1959 = vpop.f32.mrb[0].mxu0
    %v1960 = vpop.f32.mrb[0].mxu0
    %v1961 = vadd.f32 0.0, %v1960
    %v1962 = vpop.f32.mrb[0].mxu0
    %1963 = vmatprep.mubr.bf16.mxu0 0
    %1964 = vmatmul.mubr.bf16.gmra.mrb[0].mxu0 %v1031
    %v1965 = vpop.f32.mrb[0].mxu0
    %v1966 = vadd.f32 0.0, %v1965
    %v1967 = vpop.f32.mrb[0].mxu0
    %v1968 = vpop.f32.mrb[0].mxu0
    %v1969 = vadd.f32 0.0, %v1968
    %v1970 = vpop.f32.mrb[0].mxu0
    %1971 = vmatprep.mubr.bf16.mxu0 0
    %1972 = vmatmul.mubr.bf16.gmra.mrb[0].mxu0 %v1032
    %v1973 = vpop.f32.mrb[0].mxu0
    %v1974 = vadd.f32 0.0, %v1973
    %v1975 = vpop.f32.mrb[0].mxu0
    %v1976 = vpop.f32.mrb[0].mxu0
    %v1977 = vadd.f32 0.0, %v1976
    %v1978 = vpop.f32.mrb[0].mxu0
    %1979 = vmatprep.mubr.bf16.mxu0 0
    %1980 = vmatmul.mubr.bf16.gmra.mrb[0].mxu0 %v1033
    %v1981 = vpop.f32.mrb[0].mxu0
    %v1982 = vadd.f32 0.0, %v1981
    %v1983 = vpop.f32.mrb[0].mxu0
    %v1984 = vpop.f32.mrb[0].mxu0
    %v1985 = vadd.f32 0.0, %v1984
    %v1986 = vpop.f32.mrb[0].mxu0
    %1987 = vmatprep.mubr.bf16.mxu0 0
    %1988 = vmatmul.mubr.bf16.gmra.mrb[0].mxu0 %v1034
    %v1989 = vpop.f32.mrb[0].mxu0
    %v1990 = vadd.f32 0.0, %v1989
    %v1991 = vpop.f32.mrb[0].mxu0
    %v1992 = vpop.f32.mrb[0].mxu0
    %v1993 = vadd.f32 0.0, %v1992
    %v1994 = vpop.f32.mrb[0].mxu0
    %1995 = vmatprep.mubr.bf16.mxu0 0
    %1996 = vmatmul.mubr.bf16.gmra.mrb[0].mxu0 %v1035
    %v1997 = vpop.f32.mrb[0].mxu0
    %v1998 = vadd.f32 0.0, %v1997
    %v1999 = vpop.f32.mrb[0].mxu0
    %v2000 = vpop.f32.mrb[0].mxu0
    %v2001 = vadd.f32 0.0, %v2000
    %v2002 = vpop.f32.mrb[0].mxu0
    %2003 = vdwg.mxu0
    %v2004 = vadd.f32 %v1675, %v1942
    %v2005 = vadd.f32 %v1678, %v1945
    %v2006 = vadd.f32 %v1683, %v1950
    %v2007 = vadd.f32 %v1686, %v1953
    %v2008 = vadd.f32 %v1691, %v1958
    %v2009 = vadd.f32 %v1694, %v1961
    %v2010 = vadd.f32 %v1699, %v1966
    %v2011 = vadd.f32 %v1702, %v1969
    %v2012 = vadd.f32 %v1707, %v1974
    %v2013 = vadd.f32 %v1710, %v1977
    %v2014 = vadd.f32 %v1715, %v1982
    %v2015 = vadd.f32 %v1718, %v1985
    %v2016 = vadd.f32 %v1723, %v1990
    %v2017 = vadd.f32 %v1726, %v1993
    %v2018 = vadd.f32 %v1731, %v1998
    %v2019 = vadd.f32 %v1734, %v2001
    %v2020 = vld [vmem:[%s5] sm:$0x1]
    %v2022 = vlaneseq
    %v2023 = vshrl.u32 %v2022, 7
    %v2024 = vsub.s32 0, %v2023
    %v2025 = vrot.slane %v2020, %v2024
    %v2027 = vadd.f32 %v2004, %v2025
    %v2028 = vadd.f32 %v2005, %v2025
    %v2029 = vadd.f32 %v2006, %v2025
    %v2030 = vadd.f32 %v2007, %v2025
    %v2031 = vadd.f32 %v2008, %v2025
    %v2032 = vadd.f32 %v2009, %v2025
    %v2033 = vadd.f32 %v2010, %v2025
    %v2034 = vadd.f32 %v2011, %v2025
    %v2035 = vadd.f32 %v2012, %v2025
    %v2036 = vadd.f32 %v2013, %v2025
    %v2037 = vadd.f32 %v2014, %v2025
    %v2038 = vadd.f32 %v2015, %v2025
    %v2039 = vadd.f32 %v2016, %v2025
    %v2040 = vadd.f32 %v2017, %v2025
    %v2041 = vadd.f32 %v2018, %v2025
    %v2042 = vadd.f32 %v2019, %v2025
    %v2043 = vunpack.c.l.bf16 %v83
    %v2044 = vunpack.c.l.bf16 %v84
    %v2045 = vunpack.c.l.bf16 %v85
    %v2046 = vunpack.c.l.bf16 %v86
    %v2047 = vunpack.c.l.bf16 %v87
    %v2048 = vunpack.c.l.bf16 %v88
    %v2049 = vunpack.c.l.bf16 %v89
    %v2050 = vunpack.c.l.bf16 %v90
    %v2051 = vunpack.c.l.bf16 %v91
    %v2052 = vunpack.c.l.bf16 %v92
    %v2053 = vunpack.c.l.bf16 %v93
    %v2054 = vunpack.c.l.bf16 %v94
    %v2055 = vunpack.c.l.bf16 %v95
    %v2056 = vunpack.c.l.bf16 %v96
    %v2057 = vunpack.c.l.bf16 %v97
    %v2058 = vunpack.c.l.bf16 %v98
    %v2059 = vadd.f32 %v2043, %v1180
    %v2060 = vadd.f32 %v2044, %v1181
    %v2061 = vadd.f32 %v2045, %v1182
    %v2062 = vadd.f32 %v2046, %v1183
    %v2063 = vadd.f32 %v2047, %v1184
    %v2064 = vadd.f32 %v2048, %v1185
    %v2065 = vadd.f32 %v2049, %v1186
    %v2066 = vadd.f32 %v2050, %v1187
    %v2067 = vadd.f32 %v2051, %v1188
    %v2068 = vadd.f32 %v2052, %v1189
    %v2069 = vadd.f32 %v2053, %v1190
    %v2070 = vadd.f32 %v2054, %v1191
    %v2071 = vadd.f32 %v2055, %v1192
    %v2072 = vadd.f32 %v2056, %v1193
    %v2073 = vadd.f32 %v2057, %v1194
    %v2074 = vadd.f32 %v2058, %v1195
    %v2075 = vadd.f32 %v2059, %v2027
    %v2076 = vadd.f32 %v2060, %v2028
    %v2077 = vadd.f32 %v2061, %v2029
    %v2078 = vadd.f32 %v2062, %v2030
    %v2079 = vadd.f32 %v2063, %v2031
    %v2080 = vadd.f32 %v2064, %v2032
    %v2081 = vadd.f32 %v2065, %v2033
    %v2082 = vadd.f32 %v2066, %v2034
    %v2083 = vadd.f32 %v2067, %v2035
    %v2084 = vadd.f32 %v2068, %v2036
    %v2085 = vadd.f32 %v2069, %v2037
    %v2086 = vadd.f32 %v2070, %v2038
    %v2087 = vadd.f32 %v2071, %v2039
    %v2088 = vadd.f32 %v2072, %v2040
    %v2089 = vadd.f32 %v2073, %v2041
    %v2090 = vadd.f32 %v2074, %v2042
    %v2091 = vmul.f32 %v2075, 0.25
    %v2092 = vmul.f32 %v2076, 0.25
    %v2093 = vmul.f32 %v2077, 0.25
    %v2094 = vmul.f32 %v2078, 0.25
    %v2095 = vmul.f32 %v2079, 0.25
    %v2096 = vmul.f32 %v2080, 0.25
    %v2097 = vmul.f32 %v2081, 0.25
    %v2098 = vmul.f32 %v2082, 0.25
    %v2099 = vmul.f32 %v2083, 0.25
    %v2100 = vmul.f32 %v2084, 0.25
    %v2101 = vmul.f32 %v2085, 0.25
    %v2102 = vmul.f32 %v2086, 0.25
    %v2103 = vmul.f32 %v2087, 0.25
    %v2104 = vmul.f32 %v2088, 0.25
    %v2105 = vmul.f32 %v2089, 0.25
    %v2106 = vmul.f32 %v2090, 0.25
    %2107 = vst [vmem:[#allocation10] sm:$0xff] %v2091
    %2108 = vst [vmem:[#allocation10 + $0x8] sm:$0xff] %v2092
    %2109 = vst [vmem:[#allocation10 + $0x10] sm:$0xff] %v2093
    %2110 = vst [vmem:[#allocation10 + $0x18] sm:$0xff] %v2094
    %2111 = vst [vmem:[#allocation10 + $0x20] sm:$0xff] %v2095
    %2112 = vst [vmem:[#allocation10 + $0x28] sm:$0xff] %v2096
    %2113 = vst [vmem:[#allocation10 + $0x30] sm:$0xff] %v2097
    %2114 = vst [vmem:[#allocation10 + $0x38] sm:$0xff] %v2098
    %2115 = vst [vmem:[#allocation10 + $0x40] sm:$0xff] %v2099
    %2116 = vst [vmem:[#allocation10 + $0x48] sm:$0xff] %v2100
    %2117 = vst [vmem:[#allocation10 + $0x50] sm:$0xff] %v2101
    %2118 = vst [vmem:[#allocation10 + $0x58] sm:$0xff] %v2102
    %2119 = vst [vmem:[#allocation10 + $0x60] sm:$0xff] %v2103
    %2120 = vst [vmem:[#allocation10 + $0x68] sm:$0xff] %v2104
    %2121 = vst [vmem:[#allocation10 + $0x70] sm:$0xff] %v2105
    %2122 = vst [vmem:[#allocation10 + $0x78] sm:$0xff] %v2106
    %v2123 = vadd.f32 %v1180, %v2027
    %v2124 = vadd.f32 %v1181, %v2028
    %v2125 = vadd.f32 %v1182, %v2029
    %v2126 = vadd.f32 %v1183, %v2030
    %v2127 = vadd.f32 %v1184, %v2031
    %v2128 = vadd.f32 %v1185, %v2032
    %v2129 = vadd.f32 %v1186, %v2033
    %v2130 = vadd.f32 %v1187, %v2034
    %v2131 = vadd.f32 %v1188, %v2035
    %v2132 = vadd.f32 %v1189, %v2036
    %v2133 = vadd.f32 %v1190, %v2037
    %v2134 = vadd.f32 %v1191, %v2038
    %v2135 = vadd.f32 %v1192, %v2039
    %v2136 = vadd.f32 %v1193, %v2040
    %v2137 = vadd.f32 %v1194, %v2041
    %v2138 = vadd.f32 %v1195, %v2042
    %v2139 = vmul.f32 %v2123, 0.33333334
    %v2140 = vmul.f32 %v2124, 0.33333334
    %v2141 = vmul.f32 %v2125, 0.33333334
    %v2142 = vmul.f32 %v2126, 0.33333334
    %v2143 = vmul.f32 %v2127, 0.33333334
    %v2144 = vmul.f32 %v2128, 0.33333334
    %v2145 = vmul.f32 %v2129, 0.33333334
    %v2146 = vmul.f32 %v2130, 0.33333334
    %v2147 = vmul.f32 %v2131, 0.33333334
    %v2148 = vmul.f32 %v2132, 0.33333334
    %v2149 = vmul.f32 %v2133, 0.33333334
    %v2150 = vmul.f32 %v2134, 0.33333334
    %v2151 = vmul.f32 %v2135, 0.33333334
    %v2152 = vmul.f32 %v2136, 0.33333334
    %v2153 = vmul.f32 %v2137, 0.33333334
    %v2154 = vmul.f32 %v2138, 0.33333334
    %2155 = vst [vmem:[#allocation11] sm:$0xff] %v2139
    %2156 = vst [vmem:[#allocation11 + $0x8] sm:$0xff] %v2140
    %2157 = vst [vmem:[#allocation11 + $0x10] sm:$0xff] %v2141
    %2158 = vst [vmem:[#allocation11 + $0x18] sm:$0xff] %v2142
    %2159 = vst [vmem:[#allocation11 + $0x20] sm:$0xff] %v2143
    %2160 = vst [vmem:[#allocation11 + $0x28] sm:$0xff] %v2144
    %2161 = vst [vmem:[#allocation11 + $0x30] sm:$0xff] %v2145
    %2162 = vst [vmem:[#allocation11 + $0x38] sm:$0xff] %v2146
    %2163 = vst [vmem:[#allocation11 + $0x40] sm:$0xff] %v2147
    %2164 = vst [vmem:[#allocation11 + $0x48] sm:$0xff] %v2148
    %2165 = vst [vmem:[#allocation11 + $0x50] sm:$0xff] %v2149
    %2166 = vst [vmem:[#allocation11 + $0x58] sm:$0xff] %v2150
    %2167 = vst [vmem:[#allocation11 + $0x60] sm:$0xff] %v2151
    %2168 = vst [vmem:[#allocation11 + $0x68] sm:$0xff] %v2152
    %2169 = vst [vmem:[#allocation11 + $0x70] sm:$0xff] %v2153
    %2170 = vst [vmem:[#allocation11 + $0x78] sm:$0xff] %v2154
    // Predicated region
    $region42: #{tpu_custom_call.1} parent=1 // pred_check
      _
    $region43: #{tpu_custom_call.1} parent=1 // pred_check_branch
      %2172 = sbr.rel (0) target = $region45
    $region44: #{tpu_custom_call.1} parent=1 // pred_region
      %s2174 = ssub.s32 2048, 2048
      %2175 = vsyncadd [#allocation4], %s2174
      %s2176 = sshll.u32 [#allocation10], 4
      %s2177 = int_to_ptr.vmem [resolvable:$true] %s2176
      %2182 = dma.vmem_to_hbm [thread:$0]  %s2177, 2048, %s6, [#allocation4], 128, 128, 8
    $region45: #{tpu_custom_call.1} parent=1 // pred_fallthru
      _
    // Predicated region
    $region46: #{tpu_custom_call.1} parent=1 // pred_check
      _
    $region47: #{tpu_custom_call.1} parent=1 // pred_check_branch
      %2184 = sbr.rel (0) target = $region49
    $region48: #{tpu_custom_call.1} parent=1 // pred_region
      %s2186 = ssub.s32 2048, 2048
      %2187 = vsyncadd [#allocation12], %s2186
      %s2188 = sshll.u32 [#allocation11], 4
      %s2189 = int_to_ptr.vmem [resolvable:$true] %s2188
      %2194 = dma.vmem_to_hbm [thread:$0]  %s2189, 2048, %s7, [#allocation12], 128, 128, 8
    $region49: #{tpu_custom_call.1} parent=1 // pred_fallthru
      _
    // Predicated region
    $region50: #{tpu_custom_call.1} parent=1 // pred_check
      _
    $region51: #{tpu_custom_call.1} parent=1 // pred_check_branch
      %2196 = sbr.rel (0) target = $region53
    $region52: #{tpu_custom_call.1} parent=1 // pred_region
      %2197 = dma.done [#allocation4], 2048
    $region53: #{tpu_custom_call.1} parent=1 // pred_fallthru
      _
    // Predicated region
    $region54: #{tpu_custom_call.1} parent=1 // pred_check
      _
    $region55: #{tpu_custom_call.1} parent=1 // pred_check_branch
      %2199 = sbr.rel (0) target = $region57
    $region56: #{tpu_custom_call.1} parent=1 // pred_region
      %2200 = dma.done [#allocation12], 2048
    $region57: #{tpu_custom_call.1} parent=1 // pred_fallthru
      _
    %2201 = vsyncpa [#allocation3], 1
    %2202 = vsyncpa [#allocation6], 1
    %2203 = vsyncpa [#allocation9], 1
    %2204 = vsyncpa [#allocation4], 1
    %2205 = vsyncpa [#allocation12], 1

</llo_original>
